<compile_context>
chip_gen: v7x
topology: tpu7x:2x2x1
jax: 0.10.0
libtpu: 0.0.40
codegen_flags: <defaults>
</compile_context>

<pallas_src>
import functools
import math

import jax
import jax.numpy as jnp
from jax.experimental import pallas as pl
from jax.experimental.pallas import tpu as pltpu


NEG_INF = -1e30   # finite "minus infinity": no NaN even for fully-masked rows


def mhsa_kernel(x_ref, mb_ref, wqkv_ref, bqkv_ref, wo_ref, bo_ref,
                o_ref, acc_ref, *, n_heads, dph):
    f32, bf16 = jnp.float32, jnp.bfloat16
    b_blk, spad, dpad = x_ref.shape
    m_rows = b_blk * spad

    # Fold the batch block into the matmul M dimension (leading-dim merge; the
    # (sublane, lane) layout of the last two dims is unchanged).
    x = x_ref[...].reshape(m_rows, dpad)                        # bf16

    # Single fused Q/K/V projection: M = b_blk*spad, K = dpad, N = 3*dpad.
    # wq / bq were pre-scaled by 1/sqrt(dph) in the wrapper.
    qkv = jnp.dot(x, wqkv_ref[...], preferred_element_type=f32) + bqkv_ref[...]
    qkv16 = qkv.astype(bf16)                                    # one hoisted cast
    q = qkv16[:, 0 * dpad:1 * dpad]                             # 128-aligned slices
    k = qkv16[:, 1 * dpad:2 * dpad]
    v = qkv16[:, 2 * dpad:3 * dpad]

    mb = mb_ref[...]                                            # (b_blk, 1, spad) f32

    acc_ref[...] = jnp.zeros_like(acc_ref)

    # Per-head attention, batched over the b_blk batch rows of this block.
    # n_heads is a small static constant (fully unrolled).  The per-head
    # dph-lane slices below are unavoidable sub-128-lane extraction at this
    # head size; they are done once per head on the already-cast bf16 arrays.
    for h in range(n_heads):
        cols = slice(h * dph, (h + 1) * dph)
        qh = q[:, cols].reshape(b_blk, spad, dph)
        kh = k[:, cols].reshape(b_blk, spad, dph)
        vh = v[:, cols].reshape(b_blk, spad, dph)

        s = jnp.einsum("bqd,bkd->bqk", qh, kh,
                       preferred_element_type=f32)              # (b_blk, spad, spad)
        s = s + mb                                              # masked / padded keys
        m = jnp.max(s, axis=-1, keepdims=True)
        p = jnp.exp(s - m)
        l = jnp.sum(p, axis=-1, keepdims=True)
        p = p * pl.reciprocal(l, approx=True)
        # TODO(synk): training-mode attention dropout would need
        # pltpu.prng_seed / pltpu.prng_random_bits here; eval mode = identity.

        ctx = jnp.einsum("bqk,bkd->bqd", p.astype(bf16), vh,
                         preferred_element_type=f32)            # (b_blk, spad, dph)
        # Fold head h straight into the output projection (the rows of out_lin
        # belonging to head h) -> lane-dense accumulator, no lane-dim concat.
        acc_ref[...] += jnp.dot(ctx.reshape(m_rows, dph).astype(bf16),
                                wo_ref[h], preferred_element_type=f32)

    out = acc_ref[...] + bo_ref[...]
    o_ref[...] = out.reshape(b_blk, spad, dpad).astype(o_ref.dtype)


def _round_up(x, m):
    return ((x + m - 1) // m) * m


def _pick_batch_block(bs, spad, target_m=256):
    """Largest divisor of bs whose folded M = b_blk*spad stays <= target_m,
    while keeping >= 2 grid steps when bs >= 2 (v7x has two TensorCores)."""
    best = 1
    for cand in range(1, bs + 1):
        if bs % cand != 0:
            continue
        if bs >= 2 and bs // cand < 2:
            break
        if cand * spad <= max(target_m, spad):
            best = cand
    return best


def mhsa_forward(x, mask, params, *, n_heads):
    """Self-attention forward (query = key = value = x), eval mode.

    x: (bs, seq, dim) f32; mask: (bs, seq) with 1 = attend, 0 = masked.
    params: torch nn.Linear layout — w*: (out_features, in_features),
    b*: (out_features,) for the q/k/v/out projections.
    """
    # TODO(synk): cross-attention (key/value tensors different from query)
    # would need separate K/V projection matmuls; this kernel specializes to
    # the module's self-attention call pattern (query is key is value).
    bs, seq, dim = x.shape
    assert dim % n_heads == 0
    dph = dim // n_heads

    dpad = _round_up(dim, 128)   # lane-dense projections + unmasked output vst
    spad = _round_up(seq, 8)     # sublane-aligned sequence
    b_blk = _pick_batch_block(bs, spad)

    xp = jnp.pad(x, ((0, 0), (0, spad - seq), (0, dpad - dim))).astype(jnp.bfloat16)

    inv_sqrt_dph = 1.0 / math.sqrt(dph)

    def pad_w(w, scale=1.0):      # torch (out, in) -> (in, out), zero-padded
        wt = jnp.pad(w.T * scale, ((0, dpad - dim), (0, dpad - dim)))
        return wt.astype(jnp.bfloat16)

    def pad_b(b, scale=1.0):
        return jnp.pad(b * scale, (0, dpad - dim)).reshape(1, dpad).astype(jnp.float32)

    # Fused QKV weight/bias; 1/sqrt(dph) folded into the q projection so the
    # kernel needs no elementwise scale.
    w_qkv = jnp.concatenate(
        [pad_w(params["wq"], inv_sqrt_dph), pad_w(params["wk"]), pad_w(params["wv"])],
        axis=1)                                                  # (dpad, 3*dpad) bf16
    b_qkv = jnp.concatenate(
        [pad_b(params["bq"], inv_sqrt_dph), pad_b(params["bk"]), pad_b(params["bv"])],
        axis=1)                                                  # (1, 3*dpad) f32

    # out_lin weight grouped by head along the contraction axis -> wo_ref[h].
    wo_t = jnp.pad(params["wo"].T, ((0, 0), (0, dpad - dim)))        # (dim, dpad)
    wo_t = wo_t.reshape(n_heads, dph, dpad).astype(jnp.bfloat16)
    bo_p = pad_b(params["bo"])

    # Additive attention-mask bias (torch: masked_fill(mask==0, -inf)); a large
    # finite negative is used so fully-masked / padded key rows never yield NaN.
    mb = jnp.where(mask == 0, NEG_INF, 0.0).astype(jnp.float32)      # (bs, seq)
    mb = jnp.pad(mb, ((0, 0), (0, spad - seq)), constant_values=NEG_INF)
    mb = mb.reshape(bs, 1, spad)

    kernel = functools.partial(mhsa_kernel, n_heads=n_heads, dph=dph)

    out = pl.pallas_call(
        kernel,
        out_shape=jax.ShapeDtypeStruct((bs, spad, dpad), jnp.float32),
        grid_spec=pltpu.PrefetchScalarGridSpec(
            num_scalar_prefetch=0,
            grid=(bs // b_blk,),
            in_specs=[
                pl.BlockSpec((b_blk, spad, dpad), lambda i: (i, 0, 0)),   # x
                pl.BlockSpec((b_blk, 1, spad), lambda i: (i, 0, 0)),      # mask bias
                # Constant index_maps keep weights/biases VMEM-resident across
                # the grid.  TODO(synk): on v7x at real model sizes, single-
                # buffer these constant blocks and add flash-style KV tiling
                # (second "arbitrary" grid axis) before scaling seq.
                pl.BlockSpec((dpad, 3 * dpad), lambda i: (0, 0)),         # w_qkv
                pl.BlockSpec((1, 3 * dpad), lambda i: (0, 0)),            # b_qkv
                pl.BlockSpec((n_heads, dph, dpad), lambda i: (0, 0, 0)),  # wo
                pl.BlockSpec((1, dpad), lambda i: (0, 0)),                # bo
            ],
            out_specs=pl.BlockSpec((b_blk, spad, dpad), lambda i: (i, 0, 0)),
            scratch_shapes=[pltpu.VMEM((b_blk * spad, dpad), jnp.float32)],
        ),
        compiler_params=pltpu.CompilerParams(
            dimension_semantics=("parallel",),
            vmem_limit_bytes=64 * 1024 * 1024,
        ),
    )(xp, mb, w_qkv, b_qkv, wo_t, bo_p)

    return out[:, :seq, :dim]


def _reference(x, mask, params, n_heads):
    """Pure-JAX f32 replica of the torch forward (eval, query=key=value=x)."""
    bs, seq, dim = x.shape
    dph = dim // n_heads

    def lin(t, w, b):
        return jnp.einsum("bsd,od->bso", t, w) + b

    q = lin(x, params["wq"], params["bq"])
    k = lin(x, params["wk"], params["bk"])
    v = lin(x, params["wv"], params["bv"])

    def split(t):
        return t.reshape(bs, seq, n_heads, dph).transpose(0, 2, 1, 3)

    qh, kh, vh = split(q), split(k), split(v)
    qh = qh / math.sqrt(dph)
    scores = jnp.einsum("bhqd,bhkd->bhqk", qh, kh)
    scores = jnp.where((mask == 0)[:, None, None, :], -jnp.inf, scores)
    weights = jax.nn.softmax(scores, axis=-1)
    ctx = jnp.einsum("bhqk,bhkd->bhqd", weights, vh)
    ctx = ctx.transpose(0, 2, 1, 3).reshape(bs, seq, dim)
    return jnp.einsum("bsd,od->bso", ctx, params["wo"]) + params["bo"]


if __name__ == "__main__":
    # config: dim=32, n_heads=4, attention_dropout (eval identity), batch=4, seq=8
    batch, seq, dim, n_heads = 4, 8, 32, 4

    root = jax.random.PRNGKey(0)
    keys = jax.random.split(root, 9)

    x = jax.random.normal(keys[0], (batch, seq, dim), dtype=jnp.float32)

    # attention mask (bs, seq): 1 = attend, 0 = masked (a few masked keys).
    mask = jnp.ones((batch, seq), dtype=jnp.float32)
    mask = mask.at[1, seq - 1].set(0.0).at[3, 2].set(0.0)

    bound = 1.0 / math.sqrt(dim)

    def linear_init(kw, kb):
        w = jax.random.uniform(kw, (dim, dim), minval=-bound, maxval=bound,
                               dtype=jnp.float32)
        b = jax.random.uniform(kb, (dim,), minval=-bound, maxval=bound,
                               dtype=jnp.float32)
        return w, b

    wq, bq = linear_init(keys[1], keys[2])
    wk, bk = linear_init(keys[3], keys[4])
    wv, bv = linear_init(keys[5], keys[6])
    wo, bo = linear_init(keys[7], keys[8])
    params = dict(wq=wq, bq=bq, wk=wk, bk=bk, wv=wv, bv=bv, wo=wo, bo=bo)

    out = mhsa_forward(x, mask, params, n_heads=n_heads)
    out = jax.block_until_ready(out)

    ref = _reference(x, mask, params, n_heads)
    assert out.shape == (batch, seq, dim)
    # bf16 matmuls with f32 accumulation vs. exact f32 reference.
    err = jnp.max(jnp.abs(out - ref))
    assert jnp.allclose(out, ref, atol=5e-2, rtol=5e-2), (
        f"mismatch vs reference: max abs err {err}")

    print("KERNEL_OK")
</pallas_src>

<mosaic_0001>
module attributes {stable_mosaic.version = 11 : i64} {
  func.func @mhsa_kernel(%arg0: i32, %arg1: memref<2x8x128xbf16, #tpu.memory_space<vmem>>, %arg2: memref<2x1x8xf32, #tpu.memory_space<vmem>>, %arg3: memref<128x384xbf16, #tpu.memory_space<vmem>>, %arg4: memref<1x384xf32, #tpu.memory_space<vmem>>, %arg5: memref<4x8x128xbf16, #tpu.memory_space<vmem>>, %arg6: memref<1x128xf32, #tpu.memory_space<vmem>>, %arg7: memref<2x8x128xf32, #tpu.memory_space<vmem>>, %arg8: memref<16x128xf32, #tpu.memory_space<vmem>>) attributes {dimension_semantics = [#tpu.dimension_semantics<parallel>], iteration_bounds = array<i64: 2>, scalar_prefetch = 0 : i64, scratch_operands = 1 : i64, tpu.core_type = #tpu.core_type<tc>, window_params = [{transform_indices = @transform_0, window_bounds = array<i64: 2, 8, 128>}, {transform_indices = @transform_1, window_bounds = array<i64: 2, 1, 8>}, {pipeline_mode = #tpu.pipeline_mode<synchronous>, transform_indices = @transform_2, window_bounds = array<i64: 128, 384>}, {pipeline_mode = #tpu.pipeline_mode<synchronous>, transform_indices = @transform_3, window_bounds = array<i64: 1, 384>}, {pipeline_mode = #tpu.pipeline_mode<synchronous>, transform_indices = @transform_4, window_bounds = array<i64: 4, 8, 128>}, {pipeline_mode = #tpu.pipeline_mode<synchronous>, transform_indices = @transform_5, window_bounds = array<i64: 1, 128>}, {transform_indices = @transform_6, window_bounds = array<i64: 2, 8, 128>}]} {
    %c0 = arith.constant 0 : index
    %c0_0 = arith.constant 0 : index
    %c0_1 = arith.constant 0 : index
    %0 = vector.load %arg1[%c0, %c0_0, %c0_1] : memref<2x8x128xbf16, #tpu.memory_space<vmem>>, vector<2x8x128xbf16>
    %1 = vector.shape_cast %0 : vector<2x8x128xbf16> to vector<16x128xbf16>
    %c0_2 = arith.constant 0 : index
    %c0_3 = arith.constant 0 : index
    %2 = vector.load %arg3[%c0_2, %c0_3] : memref<128x384xbf16, #tpu.memory_space<vmem>>, vector<128x384xbf16>
    %cst = arith.constant dense<0.000000e+00> : vector<16x384xf32>
    %3 = tpu.matmul %1, %2, %cst {dimension_numbers = #tpu.dot_dimension_numbers<[1], [0], [0], [1], [0, 0, 1, 1], [], []>} : vector<16x128xbf16>, vector<128x384xbf16>, vector<16x384xf32> -> vector<16x384xf32>
    %c0_4 = arith.constant 0 : index
    %c0_5 = arith.constant 0 : index
    %4 = vector.load %arg4[%c0_4, %c0_5] : memref<1x384xf32, #tpu.memory_space<vmem>>, vector<1x384xf32>
    %5 = vector.broadcast %4 : vector<1x384xf32> to vector<16x384xf32>
    %6 = arith.addf %3, %5 : vector<16x384xf32>
    %7 = arith.truncf %6 : vector<16x384xf32> to vector<16x384xbf16>
    %8 = vector.extract_strided_slice %7 {offsets = [0, 0], sizes = [16, 128], strides = [1, 1]} : vector<16x384xbf16> to vector<16x128xbf16>
    %9 = vector.extract_strided_slice %7 {offsets = [0, 128], sizes = [16, 128], strides = [1, 1]} : vector<16x384xbf16> to vector<16x128xbf16>
    %10 = vector.extract_strided_slice %7 {offsets = [0, 256], sizes = [16, 128], strides = [1, 1]} : vector<16x384xbf16> to vector<16x128xbf16>
    %c0_6 = arith.constant 0 : index
    %c0_7 = arith.constant 0 : index
    %c0_8 = arith.constant 0 : index
    %11 = vector.load %arg2[%c0_6, %c0_7, %c0_8] : memref<2x1x8xf32, #tpu.memory_space<vmem>>, vector<2x1x8xf32>
    %cst_9 = arith.constant 0.000000e+00 : f32
    %12 = vector.broadcast %cst_9 : f32 to vector<16x128xf32>
    %c0_10 = arith.constant 0 : index
    %c0_11 = arith.constant 0 : index
    %13 = vector.load %arg8[%c0_10, %c0_11] : memref<16x128xf32, #tpu.memory_space<vmem>>, vector<16x128xf32>
    tpu.vector_store %arg8[%c0_10, %c0_11], %12 {strides = array<i32>} : memref<16x128xf32, #tpu.memory_space<vmem>>, vector<16x128xf32>,
    %14 = vector.extract_strided_slice %8 {offsets = [0, 0], sizes = [16, 8], strides = [1, 1]} : vector<16x128xbf16> to vector<16x8xbf16>
    %15 = vector.shape_cast %14 : vector<16x8xbf16> to vector<2x8x8xbf16>
    %16 = vector.extract_strided_slice %9 {offsets = [0, 0], sizes = [16, 8], strides = [1, 1]} : vector<16x128xbf16> to vector<16x8xbf16>
    %17 = vector.shape_cast %16 : vector<16x8xbf16> to vector<2x8x8xbf16>
    %18 = vector.extract_strided_slice %10 {offsets = [0, 0], sizes = [16, 8], strides = [1, 1]} : vector<16x128xbf16> to vector<16x8xbf16>
    %19 = vector.shape_cast %18 : vector<16x8xbf16> to vector<2x8x8xbf16>
    "tpu.trace_start"() <{level = 10 : i32, message = "bqd,bkd->bqk"}> : () -> ()
    %cst_12 = arith.constant dense<0.000000e+00> : vector<2x8x8xf32>
    %20 = tpu.matmul %15, %17, %cst_12 {dimension_numbers = #tpu.dot_dimension_numbers<[2], [2], [1], [1], [0, 0, 0, 1, 1, 1], [0], [0]>} : vector<2x8x8xbf16>, vector<2x8x8xbf16>, vector<2x8x8xf32> -> vector<2x8x8xf32>
    "tpu.trace_stop"() : () -> ()
    %21 = vector.broadcast %11 : vector<2x1x8xf32> to vector<2x8x8xf32>
    %22 = arith.addf %20, %21 : vector<2x8x8xf32>
    %cst_13 = arith.constant dense<0xFF800000> : vector<2x8xf32>
    %23 = vector.multi_reduction <maximumf>, %22, %cst_13 [2] : vector<2x8x8xf32> to vector<2x8xf32>
    %24 = vector.shape_cast %23 : vector<2x8xf32> to vector<2x8x1xf32>
    %25 = vector.broadcast %24 : vector<2x8x1xf32> to vector<2x8x8xf32>
    %26 = arith.subf %22, %25 : vector<2x8x8xf32>
    %27 = math.exp %26 : vector<2x8x8xf32>
    %cst_14 = arith.constant dense<0.000000e+00> : vector<2x8xf32>
    %28 = vector.multi_reduction <add>, %27, %cst_14 [2] : vector<2x8x8xf32> to vector<2x8xf32>
    %29 = vector.shape_cast %28 : vector<2x8xf32> to vector<2x8x1xf32>
    %30 = tpu.reciprocal %29 {approx = true} : vector<2x8x1xf32> -> vector<2x8x1xf32>
    %31 = vector.broadcast %30 : vector<2x8x1xf32> to vector<2x8x8xf32>
    %32 = arith.mulf %27, %31 : vector<2x8x8xf32>
    %33 = arith.truncf %32 : vector<2x8x8xf32> to vector<2x8x8xbf16>
    "tpu.trace_start"() <{level = 10 : i32, message = "bqk,bkd->bqd"}> : () -> ()
    %cst_15 = arith.constant dense<0.000000e+00> : vector<2x8x8xf32>
    %34 = tpu.matmul %33, %19, %cst_15 {dimension_numbers = #tpu.dot_dimension_numbers<[2], [1], [1], [2], [0, 0, 0, 1, 1, 2], [0], [0]>} : vector<2x8x8xbf16>, vector<2x8x8xbf16>, vector<2x8x8xf32> -> vector<2x8x8xf32>
    "tpu.trace_stop"() : () -> ()
    %c0_16 = arith.constant 0 : index
    %c0_17 = arith.constant 0 : index
    %35 = vector.load %arg8[%c0_16, %c0_17] : memref<16x128xf32, #tpu.memory_space<vmem>>, vector<16x128xf32>
    %36 = vector.shape_cast %34 : vector<2x8x8xf32> to vector<16x8xf32>
    %37 = arith.truncf %36 : vector<16x8xf32> to vector<16x8xbf16>
    %c0_18 = arith.constant 0 : index
    %c0_19 = arith.constant 0 : index
    %c0_20 = arith.constant 0 : index
    %38 = vector.load %arg5[%c0_18, %c0_19, %c0_20] : memref<4x8x128xbf16, #tpu.memory_space<vmem>>, vector<1x8x128xbf16>
    %39 = vector.shape_cast %38 : vector<1x8x128xbf16> to vector<8x128xbf16>
    %cst_21 = arith.constant dense<0.000000e+00> : vector<16x128xf32>
    %40 = tpu.matmul %37, %39, %cst_21 {dimension_numbers = #tpu.dot_dimension_numbers<[1], [0], [0], [1], [0, 0, 1, 1], [], []>} : vector<16x8xbf16>, vector<8x128xbf16>, vector<16x128xf32> -> vector<16x128xf32>
    %41 = arith.addf %35, %40 : vector<16x128xf32>
    %c0_22 = arith.constant 0 : index
    %c0_23 = arith.constant 0 : index
    %42 = vector.load %arg8[%c0_22, %c0_23] : memref<16x128xf32, #tpu.memory_space<vmem>>, vector<16x128xf32>
    tpu.vector_store %arg8[%c0_22, %c0_23], %41 {strides = array<i32>} : memref<16x128xf32, #tpu.memory_space<vmem>>, vector<16x128xf32>,
    %43 = vector.extract_strided_slice %8 {offsets = [0, 8], sizes = [16, 8], strides = [1, 1]} : vector<16x128xbf16> to vector<16x8xbf16>
    %44 = vector.shape_cast %43 : vector<16x8xbf16> to vector<2x8x8xbf16>
    %45 = vector.extract_strided_slice %9 {offsets = [0, 8], sizes = [16, 8], strides = [1, 1]} : vector<16x128xbf16> to vector<16x8xbf16>
    %46 = vector.shape_cast %45 : vector<16x8xbf16> to vector<2x8x8xbf16>
    %47 = vector.extract_strided_slice %10 {offsets = [0, 8], sizes = [16, 8], strides = [1, 1]} : vector<16x128xbf16> to vector<16x8xbf16>
    %48 = vector.shape_cast %47 : vector<16x8xbf16> to vector<2x8x8xbf16>
    "tpu.trace_start"() <{level = 10 : i32, message = "bqd,bkd->bqk"}> : () -> ()
    %cst_24 = arith.constant dense<0.000000e+00> : vector<2x8x8xf32>
    %49 = tpu.matmul %44, %46, %cst_24 {dimension_numbers = #tpu.dot_dimension_numbers<[2], [2], [1], [1], [0, 0, 0, 1, 1, 1], [0], [0]>} : vector<2x8x8xbf16>, vector<2x8x8xbf16>, vector<2x8x8xf32> -> vector<2x8x8xf32>
    "tpu.trace_stop"() : () -> ()
    %50 = vector.broadcast %11 : vector<2x1x8xf32> to vector<2x8x8xf32>
    %51 = arith.addf %49, %50 : vector<2x8x8xf32>
    %cst_25 = arith.constant dense<0xFF800000> : vector<2x8xf32>
    %52 = vector.multi_reduction <maximumf>, %51, %cst_25 [2] : vector<2x8x8xf32> to vector<2x8xf32>
    %53 = vector.shape_cast %52 : vector<2x8xf32> to vector<2x8x1xf32>
    %54 = vector.broadcast %53 : vector<2x8x1xf32> to vector<2x8x8xf32>
    %55 = arith.subf %51, %54 : vector<2x8x8xf32>
    %56 = math.exp %55 : vector<2x8x8xf32>
    %cst_26 = arith.constant dense<0.000000e+00> : vector<2x8xf32>
    %57 = vector.multi_reduction <add>, %56, %cst_26 [2] : vector<2x8x8xf32> to vector<2x8xf32>
    %58 = vector.shape_cast %57 : vector<2x8xf32> to vector<2x8x1xf32>
    %59 = tpu.reciprocal %58 {approx = true} : vector<2x8x1xf32> -> vector<2x8x1xf32>
    %60 = vector.broadcast %59 : vector<2x8x1xf32> to vector<2x8x8xf32>
    %61 = arith.mulf %56, %60 : vector<2x8x8xf32>
    %62 = arith.truncf %61 : vector<2x8x8xf32> to vector<2x8x8xbf16>
    "tpu.trace_start"() <{level = 10 : i32, message = "bqk,bkd->bqd"}> : () -> ()
    %cst_27 = arith.constant dense<0.000000e+00> : vector<2x8x8xf32>
    %63 = tpu.matmul %62, %48, %cst_27 {dimension_numbers = #tpu.dot_dimension_numbers<[2], [1], [1], [2], [0, 0, 0, 1, 1, 2], [0], [0]>} : vector<2x8x8xbf16>, vector<2x8x8xbf16>, vector<2x8x8xf32> -> vector<2x8x8xf32>
    "tpu.trace_stop"() : () -> ()
    %c0_28 = arith.constant 0 : index
    %c0_29 = arith.constant 0 : index
    %64 = vector.load %arg8[%c0_28, %c0_29] : memref<16x128xf32, #tpu.memory_space<vmem>>, vector<16x128xf32>
    %65 = vector.shape_cast %63 : vector<2x8x8xf32> to vector<16x8xf32>
    %66 = arith.truncf %65 : vector<16x8xf32> to vector<16x8xbf16>
    %c1 = arith.constant 1 : index
    %c0_30 = arith.constant 0 : index
    %c0_31 = arith.constant 0 : index
    %67 = vector.load %arg5[%c1, %c0_30, %c0_31] : memref<4x8x128xbf16, #tpu.memory_space<vmem>>, vector<1x8x128xbf16>
    %68 = vector.shape_cast %67 : vector<1x8x128xbf16> to vector<8x128xbf16>
    %cst_32 = arith.constant dense<0.000000e+00> : vector<16x128xf32>
    %69 = tpu.matmul %66, %68, %cst_32 {dimension_numbers = #tpu.dot_dimension_numbers<[1], [0], [0], [1], [0, 0, 1, 1], [], []>} : vector<16x8xbf16>, vector<8x128xbf16>, vector<16x128xf32> -> vector<16x128xf32>
    %70 = arith.addf %64, %69 : vector<16x128xf32>
    %c0_33 = arith.constant 0 : index
    %c0_34 = arith.constant 0 : index
    %71 = vector.load %arg8[%c0_33, %c0_34] : memref<16x128xf32, #tpu.memory_space<vmem>>, vector<16x128xf32>
    tpu.vector_store %arg8[%c0_33, %c0_34], %70 {strides = array<i32>} : memref<16x128xf32, #tpu.memory_space<vmem>>, vector<16x128xf32>,
    %72 = vector.extract_strided_slice %8 {offsets = [0, 16], sizes = [16, 8], strides = [1, 1]} : vector<16x128xbf16> to vector<16x8xbf16>
    %73 = vector.shape_cast %72 : vector<16x8xbf16> to vector<2x8x8xbf16>
    %74 = vector.extract_strided_slice %9 {offsets = [0, 16], sizes = [16, 8], strides = [1, 1]} : vector<16x128xbf16> to vector<16x8xbf16>
    %75 = vector.shape_cast %74 : vector<16x8xbf16> to vector<2x8x8xbf16>
    %76 = vector.extract_strided_slice %10 {offsets = [0, 16], sizes = [16, 8], strides = [1, 1]} : vector<16x128xbf16> to vector<16x8xbf16>
    %77 = vector.shape_cast %76 : vector<16x8xbf16> to vector<2x8x8xbf16>
    "tpu.trace_start"() <{level = 10 : i32, message = "bqd,bkd->bqk"}> : () -> ()
    %cst_35 = arith.constant dense<0.000000e+00> : vector<2x8x8xf32>
    %78 = tpu.matmul %73, %75, %cst_35 {dimension_numbers = #tpu.dot_dimension_numbers<[2], [2], [1], [1], [0, 0, 0, 1, 1, 1], [0], [0]>} : vector<2x8x8xbf16>, vector<2x8x8xbf16>, vector<2x8x8xf32> -> vector<2x8x8xf32>
    "tpu.trace_stop"() : () -> ()
    %79 = vector.broadcast %11 : vector<2x1x8xf32> to vector<2x8x8xf32>
    %80 = arith.addf %78, %79 : vector<2x8x8xf32>
    %cst_36 = arith.constant dense<0xFF800000> : vector<2x8xf32>
    %81 = vector.multi_reduction <maximumf>, %80, %cst_36 [2] : vector<2x8x8xf32> to vector<2x8xf32>
    %82 = vector.shape_cast %81 : vector<2x8xf32> to vector<2x8x1xf32>
    %83 = vector.broadcast %82 : vector<2x8x1xf32> to vector<2x8x8xf32>
    %84 = arith.subf %80, %83 : vector<2x8x8xf32>
    %85 = math.exp %84 : vector<2x8x8xf32>
    %cst_37 = arith.constant dense<0.000000e+00> : vector<2x8xf32>
    %86 = vector.multi_reduction <add>, %85, %cst_37 [2] : vector<2x8x8xf32> to vector<2x8xf32>
    %87 = vector.shape_cast %86 : vector<2x8xf32> to vector<2x8x1xf32>
    %88 = tpu.reciprocal %87 {approx = true} : vector<2x8x1xf32> -> vector<2x8x1xf32>
    %89 = vector.broadcast %88 : vector<2x8x1xf32> to vector<2x8x8xf32>
    %90 = arith.mulf %85, %89 : vector<2x8x8xf32>
    %91 = arith.truncf %90 : vector<2x8x8xf32> to vector<2x8x8xbf16>
    "tpu.trace_start"() <{level = 10 : i32, message = "bqk,bkd->bqd"}> : () -> ()
    %cst_38 = arith.constant dense<0.000000e+00> : vector<2x8x8xf32>
    %92 = tpu.matmul %91, %77, %cst_38 {dimension_numbers = #tpu.dot_dimension_numbers<[2], [1], [1], [2], [0, 0, 0, 1, 1, 2], [0], [0]>} : vector<2x8x8xbf16>, vector<2x8x8xbf16>, vector<2x8x8xf32> -> vector<2x8x8xf32>
    "tpu.trace_stop"() : () -> ()
    %c0_39 = arith.constant 0 : index
    %c0_40 = arith.constant 0 : index
    %93 = vector.load %arg8[%c0_39, %c0_40] : memref<16x128xf32, #tpu.memory_space<vmem>>, vector<16x128xf32>
    %94 = vector.shape_cast %92 : vector<2x8x8xf32> to vector<16x8xf32>
    %95 = arith.truncf %94 : vector<16x8xf32> to vector<16x8xbf16>
    %c2 = arith.constant 2 : index
    %c0_41 = arith.constant 0 : index
    %c0_42 = arith.constant 0 : index
    %96 = vector.load %arg5[%c2, %c0_41, %c0_42] : memref<4x8x128xbf16, #tpu.memory_space<vmem>>, vector<1x8x128xbf16>
    %97 = vector.shape_cast %96 : vector<1x8x128xbf16> to vector<8x128xbf16>
    %cst_43 = arith.constant dense<0.000000e+00> : vector<16x128xf32>
    %98 = tpu.matmul %95, %97, %cst_43 {dimension_numbers = #tpu.dot_dimension_numbers<[1], [0], [0], [1], [0, 0, 1, 1], [], []>} : vector<16x8xbf16>, vector<8x128xbf16>, vector<16x128xf32> -> vector<16x128xf32>
    %99 = arith.addf %93, %98 : vector<16x128xf32>
    %c0_44 = arith.constant 0 : index
    %c0_45 = arith.constant 0 : index
    %100 = vector.load %arg8[%c0_44, %c0_45] : memref<16x128xf32, #tpu.memory_space<vmem>>, vector<16x128xf32>
    tpu.vector_store %arg8[%c0_44, %c0_45], %99 {strides = array<i32>} : memref<16x128xf32, #tpu.memory_space<vmem>>, vector<16x128xf32>,
    %101 = vector.extract_strided_slice %8 {offsets = [0, 24], sizes = [16, 8], strides = [1, 1]} : vector<16x128xbf16> to vector<16x8xbf16>
    %102 = vector.shape_cast %101 : vector<16x8xbf16> to vector<2x8x8xbf16>
    %103 = vector.extract_strided_slice %9 {offsets = [0, 24], sizes = [16, 8], strides = [1, 1]} : vector<16x128xbf16> to vector<16x8xbf16>
    %104 = vector.shape_cast %103 : vector<16x8xbf16> to vector<2x8x8xbf16>
    %105 = vector.extract_strided_slice %10 {offsets = [0, 24], sizes = [16, 8], strides = [1, 1]} : vector<16x128xbf16> to vector<16x8xbf16>
    %106 = vector.shape_cast %105 : vector<16x8xbf16> to vector<2x8x8xbf16>
    "tpu.trace_start"() <{level = 10 : i32, message = "bqd,bkd->bqk"}> : () -> ()
    %cst_46 = arith.constant dense<0.000000e+00> : vector<2x8x8xf32>
    %107 = tpu.matmul %102, %104, %cst_46 {dimension_numbers = #tpu.dot_dimension_numbers<[2], [2], [1], [1], [0, 0, 0, 1, 1, 1], [0], [0]>} : vector<2x8x8xbf16>, vector<2x8x8xbf16>, vector<2x8x8xf32> -> vector<2x8x8xf32>
    "tpu.trace_stop"() : () -> ()
    %108 = vector.broadcast %11 : vector<2x1x8xf32> to vector<2x8x8xf32>
    %109 = arith.addf %107, %108 : vector<2x8x8xf32>
    %cst_47 = arith.constant dense<0xFF800000> : vector<2x8xf32>
    %110 = vector.multi_reduction <maximumf>, %109, %cst_47 [2] : vector<2x8x8xf32> to vector<2x8xf32>
    %111 = vector.shape_cast %110 : vector<2x8xf32> to vector<2x8x1xf32>
    %112 = vector.broadcast %111 : vector<2x8x1xf32> to vector<2x8x8xf32>
    %113 = arith.subf %109, %112 : vector<2x8x8xf32>
    %114 = math.exp %113 : vector<2x8x8xf32>
    %cst_48 = arith.constant dense<0.000000e+00> : vector<2x8xf32>
    %115 = vector.multi_reduction <add>, %114, %cst_48 [2] : vector<2x8x8xf32> to vector<2x8xf32>
    %116 = vector.shape_cast %115 : vector<2x8xf32> to vector<2x8x1xf32>
    %117 = tpu.reciprocal %116 {approx = true} : vector<2x8x1xf32> -> vector<2x8x1xf32>
    %118 = vector.broadcast %117 : vector<2x8x1xf32> to vector<2x8x8xf32>
    %119 = arith.mulf %114, %118 : vector<2x8x8xf32>
    %120 = arith.truncf %119 : vector<2x8x8xf32> to vector<2x8x8xbf16>
    "tpu.trace_start"() <{level = 10 : i32, message = "bqk,bkd->bqd"}> : () -> ()
    %cst_49 = arith.constant dense<0.000000e+00> : vector<2x8x8xf32>
    %121 = tpu.matmul %120, %106, %cst_49 {dimension_numbers = #tpu.dot_dimension_numbers<[2], [1], [1], [2], [0, 0, 0, 1, 1, 2], [0], [0]>} : vector<2x8x8xbf16>, vector<2x8x8xbf16>, vector<2x8x8xf32> -> vector<2x8x8xf32>
    "tpu.trace_stop"() : () -> ()
    %c0_50 = arith.constant 0 : index
    %c0_51 = arith.constant 0 : index
    %122 = vector.load %arg8[%c0_50, %c0_51] : memref<16x128xf32, #tpu.memory_space<vmem>>, vector<16x128xf32>
    %123 = vector.shape_cast %121 : vector<2x8x8xf32> to vector<16x8xf32>
    %124 = arith.truncf %123 : vector<16x8xf32> to vector<16x8xbf16>
    %c3 = arith.constant 3 : index
    %c0_52 = arith.constant 0 : index
    %c0_53 = arith.constant 0 : index
    %125 = vector.load %arg5[%c3, %c0_52, %c0_53] : memref<4x8x128xbf16, #tpu.memory_space<vmem>>, vector<1x8x128xbf16>
    %126 = vector.shape_cast %125 : vector<1x8x128xbf16> to vector<8x128xbf16>
    %cst_54 = arith.constant dense<0.000000e+00> : vector<16x128xf32>
    %127 = tpu.matmul %124, %126, %cst_54 {dimension_numbers = #tpu.dot_dimension_numbers<[1], [0], [0], [1], [0, 0, 1, 1], [], []>} : vector<16x8xbf16>, vector<8x128xbf16>, vector<16x128xf32> -> vector<16x128xf32>
    %128 = arith.addf %122, %127 : vector<16x128xf32>
    %c0_55 = arith.constant 0 : index
    %c0_56 = arith.constant 0 : index
    %129 = vector.load %arg8[%c0_55, %c0_56] : memref<16x128xf32, #tpu.memory_space<vmem>>, vector<16x128xf32>
    tpu.vector_store %arg8[%c0_55, %c0_56], %128 {strides = array<i32>} : memref<16x128xf32, #tpu.memory_space<vmem>>, vector<16x128xf32>,
    %c0_57 = arith.constant 0 : index
    %c0_58 = arith.constant 0 : index
    %130 = vector.load %arg8[%c0_57, %c0_58] : memref<16x128xf32, #tpu.memory_space<vmem>>, vector<16x128xf32>
    %c0_59 = arith.constant 0 : index
    %c0_60 = arith.constant 0 : index
    %131 = vector.load %arg6[%c0_59, %c0_60] : memref<1x128xf32, #tpu.memory_space<vmem>>, vector<1x128xf32>
    %132 = vector.broadcast %131 : vector<1x128xf32> to vector<16x128xf32>
    %133 = arith.addf %130, %132 : vector<16x128xf32>
    %134 = vector.shape_cast %133 : vector<16x128xf32> to vector<2x8x128xf32>
    %c0_61 = arith.constant 0 : index
    %c0_62 = arith.constant 0 : index
    %c0_63 = arith.constant 0 : index
    %135 = vector.load %arg7[%c0_61, %c0_62, %c0_63] : memref<2x8x128xf32, #tpu.memory_space<vmem>>, vector<2x8x128xf32>
    tpu.vector_store %arg7[%c0_61, %c0_62, %c0_63], %134 {strides = array<i32>} : memref<2x8x128xf32, #tpu.memory_space<vmem>>, vector<2x8x128xf32>,
    return
  }
  func.func @transform_0(%arg0: i32) -> (i32, i32, i32) {
    %c0_i32 = arith.constant 0 : i32
    %c0_i32_0 = arith.constant 0 : i32
    %c0_i32_1 = arith.constant 0 : i32
    return %arg0, %c0_i32, %c0_i32_0 : i32, i32, i32
  }
  func.func @transform_1(%arg0: i32) -> (i32, i32, i32) {
    %c0_i32 = arith.constant 0 : i32
    %c0_i32_0 = arith.constant 0 : i32
    %c0_i32_1 = arith.constant 0 : i32
    return %arg0, %c0_i32, %c0_i32_0 : i32, i32, i32
  }
  func.func @transform_2(%arg0: i32) -> (i32, i32) {
    %c0_i32 = arith.constant 0 : i32
    %c0_i32_0 = arith.constant 0 : i32
    %c0_i32_1 = arith.constant 0 : i32
    return %c0_i32, %c0_i32_0 : i32, i32
  }
  func.func @transform_3(%arg0: i32) -> (i32, i32) {
    %c0_i32 = arith.constant 0 : i32
    %c0_i32_0 = arith.constant 0 : i32
    %c0_i32_1 = arith.constant 0 : i32
    return %c0_i32, %c0_i32_0 : i32, i32
  }
  func.func @transform_4(%arg0: i32) -> (i32, i32, i32) {
    %c0_i32 = arith.constant 0 : i32
    %c0_i32_0 = arith.constant 0 : i32
    %c0_i32_1 = arith.constant 0 : i32
    %c0_i32_2 = arith.constant 0 : i32
    return %c0_i32, %c0_i32_0, %c0_i32_1 : i32, i32, i32
  }
  func.func @transform_5(%arg0: i32) -> (i32, i32) {
    %c0_i32 = arith.constant 0 : i32
    %c0_i32_0 = arith.constant 0 : i32
    %c0_i32_1 = arith.constant 0 : i32
    return %c0_i32, %c0_i32_0 : i32, i32
  }
  func.func @transform_6(%arg0: i32) -> (i32, i32, i32) {
    %c0_i32 = arith.constant 0 : i32
    %c0_i32_0 = arith.constant 0 : i32
    %c0_i32_1 = arith.constant 0 : i32
    return %arg0, %c0_i32, %c0_i32_0 : i32, i32, i32
  }
}

</mosaic_0001>

<llo_original>
// kernel: tpu_custom_call.1
$region0: #{tpu_custom_call.1}
  #allocation0 [shape = 'u32[]', space=smem, size = 0x4, offset = 0x4, fixed_abs, tag = 'smem constant byte address 0x4 - core index']
  #allocation1 [shape = 'u32[144,128]{1,0:T(1,128)}', space=vmem, size = 0x12000, scoped, tag = 'internal scratch']
  #allocation2 [shape = 'f32[16,128]{1,0:T(8,128)}', space=vmem, size = 0x2000, scoped, tag = 'scratch operand']
  %s0 = inlined_call_operand.hbm [shape: bf16[4,8,128], index: 0, kind: input, shape index: {}]
  %s1 = inlined_call_operand.hbm [shape: f32[4,1,8], index: 1, kind: input, shape index: {}]
  %s2 = inlined_call_operand.hbm [shape: bf16[128,384], index: 2, kind: input, shape index: {}]
  %s3 = inlined_call_operand.hbm [shape: f32[1,384], index: 3, kind: input, shape index: {}]
  %s4 = inlined_call_operand.hbm [shape: bf16[4,8,128], index: 4, kind: input, shape index: {}]
  %s5 = inlined_call_operand.hbm [shape: f32[1,128], index: 5, kind: input, shape index: {}]
  %s6 = inlined_call_operand.hbm [shape: f32[4,8,128], index: 6, kind: output, shape index: {}]
  %s7 = sld [smem:[#allocation0]]
  $region81: #{tpu_custom_call.1} parent=0
    _
  %s9 = ssub.s32 1, %s7
  %s10 = scalar_select 0, %s9, %s7
  $region1: #{tpu_custom_call.1} parent=0
    #allocation3 [shape = 'u8[8192]{0}', space=vmem, size = 0x2000, scoped, tag = 'input window, operand 0']
    #allocation4 [shape = 's32[2]{0}', space=sflag, size = 0x8, scoped, tag = 'scoped memory for tpu_custom_call.1']
    #allocation5 [shape = 's32[2]{0}', space=sflag, size = 0x8, scoped, tag = 'scoped memory for tpu_custom_call.1']
    #allocation6 [shape = 'u8[2048]{0}', space=vmem, size = 0x800, scoped, tag = 'input window, operand 1']
    #allocation7 [shape = 's32[2]{0}', space=sflag, size = 0x8, scoped, tag = 'scoped memory for tpu_custom_call.1']
    #allocation8 [shape = 'u8[98304]{0}', space=vmem, size = 0x18000, scoped, tag = 'input window, operand 2, single buffered']
    #allocation9 [shape = 'u8[1536]{0}', space=vmem, size = 0x800, scoped, tag = 'input window, operand 3, single buffered']
    #allocation10 [shape = 's32[1]{0}', space=sflag, size = 0x4, scoped, tag = 'scoped memory for tpu_custom_call.1']
    #allocation11 [shape = 'u8[8192]{0}', space=vmem, size = 0x2000, scoped, tag = 'input window, operand 4, single buffered']
    #allocation12 [shape = 'u8[512]{0}', space=vmem, size = 0x400, scoped, tag = 'input window, operand 5, single buffered']
    #allocation13 [shape = 's32[1]{0}', space=sflag, size = 0x4, scoped, tag = 'scoped memory for tpu_custom_call.1']
    #allocation14 [shape = 'u8[16384]{0}', space=vmem, size = 0x4000, scoped, tag = 'output window, operand 0']
    %11 = vsyncpa [#allocation4], 0
    %s12 = scalar_lea.sflag [#allocation4], 1
    %13 = vsyncpa %s12, 0
    %14 = vsyncpa [#allocation7], 0
    %s15 = scalar_lea.sflag [#allocation7], 1
    %16 = vsyncpa %s15, 0
    %17 = vsyncpa [#allocation10], 0
    %18 = vsyncpa [#allocation13], 0
    %19 = vsyncpa [#allocation5], 0
    %s20 = scalar_lea.sflag [#allocation5], 1
    %21 = vsyncpa %s20, 0
    loop: start=0, step=1, limit=4
    $region2: #{tpu_custom_call.1} parent=1 // loop_pre_header
      _
    $region3: #{tpu_custom_call.1} parent=1 // loop_header
      %s23 = sphi 0, %s27
      %p24 = scmp.ge.s32.totalorder %s23, 4
      %s33 = sphi 0, %s35
      %s36 = sphi 0, %s33
      %s37 = sphi 0, %s36
      %s53 = sphi 0, %s37
      %s59 = sphi 0, %s61
      %s62 = sphi 0, %s59
      %s63 = sphi 0, %s62
      %s79 = sphi 0, %s63
      %s83 = sphi 0, %s83
      %s85 = sphi 0, %s83
      %s86 = sphi 0, %s85
      %s100 = sphi 0, %s86
      %s104 = sphi 0, %s104
      %s106 = sphi 0, %s104
      %s107 = sphi 0, %s106
      %s121 = sphi 0, %s107
      %s125 = sphi 0, %s125
      %s127 = sphi 0, %s125
      %s128 = sphi 0, %s127
      %s142 = sphi 0, %s128
      %s146 = sphi 0, %s146
      %s148 = sphi 0, %s146
      %s149 = sphi 0, %s148
      %s163 = sphi 0, %s149
      %s169 = sphi 0, %s171
      %s172 = sphi 0, %s169
      %s173 = sphi 0, %s172
      %s189 = sphi 0, %s173
    $region4: #{tpu_custom_call.1} parent=1 // loop_header_branch
      %26 = sbr.rel (%p24) target = $region8
    $region5: #{tpu_custom_call.1} parent=1 // loop_body
      %s28 = ssub.s32 %s23, 1
      %s29 = ssub.s32 %s23, 2
      %s30 = sadd.s32 %s23, 1
      %s31 = ssub.s32 %s23, %s30
      %p32 = scmp.eq.s32.totalorder %s31, 0
      %s34 = sadd.s32 %s33, 1
      %s35 = scalar_select %p32, %s33, %s34
      %p38 = pneg %p32
      %p39 = scmp.eq.s32.totalorder %s23, 1
      %p40 = por %p38, %p39
      %p41 = scmp.ne.s32.totalorder %s33, %s36
      %p42 = scmp.eq.s32.totalorder %s23, 0
      %p43 = por %p41, %p42
      %p44 = scmp.ne.s32.totalorder %s33, %s36
      %p45 = scmp.eq.s32.totalorder %s28, 1
      %p46 = por %p44, %p45
      %p47 = scmp.ne.s32.totalorder %s36, %s37
      %p48 = scmp.eq.s32.totalorder %s28, 0
      %p49 = por %p47, %p48
      %p50 = scmp.ne.s32.totalorder %s36, %s37
      %p51 = scmp.eq.s32.totalorder %s29, 1
      %p52 = por %p50, %p51
      %p54 = scmp.ne.s32.totalorder %s37, %s53
      %p55 = scmp.eq.s32.totalorder %s29, 0
      %p56 = por %p54, %p55
      %s57 = ssub.s32 %s23, %s30
      %p58 = scmp.eq.s32.totalorder %s57, 0
      %s60 = sadd.s32 %s59, 1
      %s61 = scalar_select %p58, %s59, %s60
      %p64 = pneg %p58
      %p65 = scmp.eq.s32.totalorder %s23, 1
      %p66 = por %p64, %p65
      %p67 = scmp.ne.s32.totalorder %s59, %s62
      %p68 = scmp.eq.s32.totalorder %s23, 0
      %p69 = por %p67, %p68
      %p70 = scmp.ne.s32.totalorder %s59, %s62
      %p71 = scmp.eq.s32.totalorder %s28, 1
      %p72 = por %p70, %p71
      %p73 = scmp.ne.s32.totalorder %s62, %s63
      %p74 = scmp.eq.s32.totalorder %s28, 0
      %p75 = por %p73, %p74
      %p76 = scmp.ne.s32.totalorder %s62, %s63
      %p77 = scmp.eq.s32.totalorder %s29, 1
      %p78 = por %p76, %p77
      %p80 = scmp.ne.s32.totalorder %s63, %s79
      %p81 = scmp.eq.s32.totalorder %s29, 0
      %p82 = por %p80, %p81
      %s84 = sadd.s32 %s83, 1
      %p87 = scmp.eq.s32.totalorder %s23, 1
      %p88 = scmp.ne.s32.totalorder %s83, %s85
      %p89 = scmp.eq.s32.totalorder %s23, 0
      %p90 = por %p88, %p89
      %p91 = scmp.ne.s32.totalorder %s83, %s85
      %p92 = scmp.eq.s32.totalorder %s28, 1
      %p93 = por %p91, %p92
      %p94 = scmp.ne.s32.totalorder %s85, %s86
      %p95 = scmp.eq.s32.totalorder %s28, 0
      %p96 = por %p94, %p95
      %p97 = scmp.ne.s32.totalorder %s85, %s86
      %p98 = scmp.eq.s32.totalorder %s29, 1
      %p99 = por %p97, %p98
      %p101 = scmp.ne.s32.totalorder %s86, %s100
      %p102 = scmp.eq.s32.totalorder %s29, 0
      %p103 = por %p101, %p102
      %s105 = sadd.s32 %s104, 1
      %p108 = scmp.eq.s32.totalorder %s23, 1
      %p109 = scmp.ne.s32.totalorder %s104, %s106
      %p110 = scmp.eq.s32.totalorder %s23, 0
      %p111 = por %p109, %p110
      %p112 = scmp.ne.s32.totalorder %s104, %s106
      %p113 = scmp.eq.s32.totalorder %s28, 1
      %p114 = por %p112, %p113
      %p115 = scmp.ne.s32.totalorder %s106, %s107
      %p116 = scmp.eq.s32.totalorder %s28, 0
      %p117 = por %p115, %p116
      %p118 = scmp.ne.s32.totalorder %s106, %s107
      %p119 = scmp.eq.s32.totalorder %s29, 1
      %p120 = por %p118, %p119
      %p122 = scmp.ne.s32.totalorder %s107, %s121
      %p123 = scmp.eq.s32.totalorder %s29, 0
      %p124 = por %p122, %p123
      %s126 = sadd.s32 %s125, 1
      %p129 = scmp.eq.s32.totalorder %s23, 1
      %p130 = scmp.ne.s32.totalorder %s125, %s127
      %p131 = scmp.eq.s32.totalorder %s23, 0
      %p132 = por %p130, %p131
      %p133 = scmp.ne.s32.totalorder %s125, %s127
      %p134 = scmp.eq.s32.totalorder %s28, 1
      %p135 = por %p133, %p134
      %p136 = scmp.ne.s32.totalorder %s127, %s128
      %p137 = scmp.eq.s32.totalorder %s28, 0
      %p138 = por %p136, %p137
      %p139 = scmp.ne.s32.totalorder %s127, %s128
      %p140 = scmp.eq.s32.totalorder %s29, 1
      %p141 = por %p139, %p140
      %p143 = scmp.ne.s32.totalorder %s128, %s142
      %p144 = scmp.eq.s32.totalorder %s29, 0
      %p145 = por %p143, %p144
      %s147 = sadd.s32 %s146, 1
      %p150 = scmp.eq.s32.totalorder %s23, 1
      %p151 = scmp.ne.s32.totalorder %s146, %s148
      %p152 = scmp.eq.s32.totalorder %s23, 0
      %p153 = por %p151, %p152
      %p154 = scmp.ne.s32.totalorder %s146, %s148
      %p155 = scmp.eq.s32.totalorder %s28, 1
      %p156 = por %p154, %p155
      %p157 = scmp.ne.s32.totalorder %s148, %s149
      %p158 = scmp.eq.s32.totalorder %s28, 0
      %p159 = por %p157, %p158
      %p160 = scmp.ne.s32.totalorder %s148, %s149
      %p161 = scmp.eq.s32.totalorder %s29, 1
      %p162 = por %p160, %p161
      %p164 = scmp.ne.s32.totalorder %s149, %s163
      %p165 = scmp.eq.s32.totalorder %s29, 0
      %p166 = por %p164, %p165
      %s167 = ssub.s32 %s23, %s30
      %p168 = scmp.eq.s32.totalorder %s167, 0
      %s170 = sadd.s32 %s169, 1
      %s171 = scalar_select %p168, %s169, %s170
      %p174 = pneg %p168
      %p175 = scmp.eq.s32.totalorder %s23, 1
      %p176 = por %p174, %p175
      %p177 = scmp.ne.s32.totalorder %s169, %s172
      %p178 = scmp.eq.s32.totalorder %s23, 0
      %p179 = por %p177, %p178
      %p180 = scmp.ne.s32.totalorder %s169, %s172
      %p181 = scmp.eq.s32.totalorder %s28, 1
      %p182 = por %p180, %p181
      %p183 = scmp.ne.s32.totalorder %s172, %s173
      %p184 = scmp.eq.s32.totalorder %s28, 0
      %p185 = por %p183, %p184
      %p186 = scmp.ne.s32.totalorder %s172, %s173
      %p187 = scmp.eq.s32.totalorder %s29, 1
      %p188 = por %p186, %p187
      %p190 = scmp.ne.s32.totalorder %s173, %s189
      %p191 = scmp.eq.s32.totalorder %s29, 0
      %p192 = por %p190, %p191
      %p193 = scmp.le.s32.totalorder 1, %s23
      %p194 = scmp.lt.s32.totalorder %s23, 3
      %p195 = pnand %p193, %p194
      %p196 = pneg %p195
      // Predicated region
      $region9: #{tpu_custom_call.1} parent=5 // pred_check
        _
      $region10: #{tpu_custom_call.1} parent=5 // pred_check_branch
        %198 = sbr.rel (%p195) target = $region12
      $region11: #{tpu_custom_call.1} parent=5 // pred_region
        %s199 = ssub.s32 %s23, 1
        // Predicated region
        $region13: #{tpu_custom_call.1} parent=11 // pred_check
          %p200 = pneg %p96
        $region14: #{tpu_custom_call.1} parent=11 // pred_check_branch
          %202 = sbr.rel (%p200) target = $region16
        $region15: #{tpu_custom_call.1} parent=11 // pred_region
          %s204 = ssub.s32 3072, 3072
          %205 = vsyncadd [#allocation7], %s204
          %s206 = sshll.u32 [#allocation8], 4
          %s207 = int_to_ptr.vmem [resolvable:$true] %s206
          %212 = dma.hbm_to_vmem [thread:$0]  %s2, 3072, %s207, [#allocation7], 192, 192, 12
        $region16: #{tpu_custom_call.1} parent=11 // pred_fallthru
          _
        // Predicated region
        $region17: #{tpu_custom_call.1} parent=11 // pred_check
          %p213 = pneg %p117
        $region18: #{tpu_custom_call.1} parent=11 // pred_check_branch
          %215 = sbr.rel (%p213) target = $region20
        $region19: #{tpu_custom_call.1} parent=11 // pred_region
          %s217 = ssub.s32 48, 48
          %218 = vsyncadd [#allocation10], %s217
          %s220 = sshll.u32 [#allocation9], 4
          %s221 = int_to_ptr.vmem [resolvable:$true] %s220
          %223 = dma.hbm_to_vmem [thread:$0]  %s3, 48, %s221, [#allocation10]
        $region20: #{tpu_custom_call.1} parent=11 // pred_fallthru
          _
        // Predicated region
        $region21: #{tpu_custom_call.1} parent=11 // pred_check
          %p224 = pneg %p138
        $region22: #{tpu_custom_call.1} parent=11 // pred_check_branch
          %226 = sbr.rel (%p224) target = $region24
        $region23: #{tpu_custom_call.1} parent=11 // pred_region
          %s228 = ssub.s32 256, 256
          %229 = vsyncadd [#allocation10], %s228
          %s230 = sshll.u32 [#allocation11], 4
          %s231 = int_to_ptr.vmem [resolvable:$true] %s230
          %236 = dma.hbm_to_vmem [thread:$0]  %s4, 256, %s231, [#allocation10], 64, 64, 4
        $region24: #{tpu_custom_call.1} parent=11 // pred_fallthru
          _
        // Predicated region
        $region25: #{tpu_custom_call.1} parent=11 // pred_check
          %p237 = pneg %p159
        $region26: #{tpu_custom_call.1} parent=11 // pred_check_branch
          %239 = sbr.rel (%p237) target = $region28
        $region27: #{tpu_custom_call.1} parent=11 // pred_region
          %s241 = ssub.s32 16, 16
          %242 = vsyncadd [#allocation13], %s241
          %s244 = sshll.u32 [#allocation12], 4
          %s245 = int_to_ptr.vmem [resolvable:$true] %s244
          %247 = dma.hbm_to_vmem [thread:$0]  %s5, 16, %s245, [#allocation13]
        $region28: #{tpu_custom_call.1} parent=11 // pred_fallthru
          _
      $region12: #{tpu_custom_call.1} parent=5 // pred_fallthru
        _
      %p248 = scmp.lt.s32.totalorder %s23, 2
      // Predicated region
      $region29: #{tpu_custom_call.1} parent=5 // pred_check
        %p249 = pneg %p248
      $region30: #{tpu_custom_call.1} parent=5 // pred_check_branch
        %251 = sbr.rel (%p249) target = $region32
      $region31: #{tpu_custom_call.1} parent=5 // pred_region
        // Predicated region
        $region33: #{tpu_custom_call.1} parent=31 // pred_check
          %p252 = pneg %p43
        $region34: #{tpu_custom_call.1} parent=31 // pred_check_branch
          %254 = sbr.rel (%p252) target = $region36
        $region35: #{tpu_custom_call.1} parent=31 // pred_region
          %s255 = sand.u32 %s33, 1
          %s256 = scalar_lea.sflag [#allocation4], %s255
          %s257 = sand.u32 %s33, 1
          %s258 = smul.addr %s257, 8
          %s259 = scalar_lea.vmem [#allocation3], %s258
          %s260 = smul.u32 2, %s23
          %s262 = ssub.s32 128, 128
          %263 = vsyncadd %s256, %s262
          %s264 = smul.addr %s260, 64
          %s265 = scalar_lea.hbm %s0, %s264
          %s266 = sshll.u32 %s259, 4
          %s267 = int_to_ptr.vmem [resolvable:$true] %s266
          %272 = dma.hbm_to_vmem [thread:$0]  %s265, 128, %s267, %s256, 64, 64, 4
        $region36: #{tpu_custom_call.1} parent=31 // pred_fallthru
          _
        // Predicated region
        $region37: #{tpu_custom_call.1} parent=31 // pred_check
          %p273 = pneg %p69
        $region38: #{tpu_custom_call.1} parent=31 // pred_check_branch
          %275 = sbr.rel (%p273) target = $region40
        $region39: #{tpu_custom_call.1} parent=31 // pred_region
          %s276 = sand.u32 %s23, 1
          %s277 = scalar_lea.sflag [#allocation7], %s276
          %s278 = sand.u32 %s59, 1
          %s279 = smul.addr %s278, 2
          %s280 = scalar_lea.vmem [#allocation6], %s279
          %s281 = smul.u32 2, %s23
          %s283 = ssub.s32 32, 32
          %284 = vsyncadd %s277, %s283
          %s285 = smul.addr %s281, 16
          %s286 = scalar_lea.hbm %s1, %s285
          %s287 = sshll.u32 %s280, 4
          %s288 = int_to_ptr.vmem [resolvable:$true] %s287
          %293 = dma.hbm_to_vmem [thread:$0]  %s286, 32, %s288, %s277, 16, 16, 1
        $region40: #{tpu_custom_call.1} parent=31 // pred_fallthru
          _
      $region32: #{tpu_custom_call.1} parent=5 // pred_fallthru
        _
      %p294 = scmp.le.s32.totalorder 1, %s23
      %p295 = scmp.lt.s32.totalorder %s23, 3
      %p296 = pnand %p294, %p295
      %p297 = pneg %p296
      // Predicated region
      $region41: #{tpu_custom_call.1} parent=5 // pred_check
        _
      $region42: #{tpu_custom_call.1} parent=5 // pred_check_branch
        %299 = sbr.rel (%p296) target = $region44
      $region43: #{tpu_custom_call.1} parent=5 // pred_region
        %s300 = ssub.s32 %s23, 1
        %s301 = sand.u32 %s36, 1
        %s302 = scalar_lea.sflag [#allocation4], %s301
        %s303 = sand.u32 %s36, 1
        %s304 = smul.addr %s303, 8
        %s305 = scalar_lea.vmem [#allocation3], %s304
        // Predicated region
        $region45: #{tpu_custom_call.1} parent=43 // pred_check
          %p306 = pneg %p49
        $region46: #{tpu_custom_call.1} parent=43 // pred_check_branch
          %308 = sbr.rel (%p306) target = $region48
        $region47: #{tpu_custom_call.1} parent=43 // pred_region
          %309 = dma.done %s302, 128
        $region48: #{tpu_custom_call.1} parent=43 // pred_fallthru
          _
        %s310 = sand.u32 %s28, 1
        %s311 = scalar_lea.sflag [#allocation7], %s310
        %s312 = sand.u32 %s62, 1
        %s313 = smul.addr %s312, 2
        %s314 = scalar_lea.vmem [#allocation6], %s313
        // Predicated region
        $region49: #{tpu_custom_call.1} parent=43 // pred_check
          %p315 = pneg %p75
        $region50: #{tpu_custom_call.1} parent=43 // pred_check_branch
          %317 = sbr.rel (%p315) target = $region52
        $region51: #{tpu_custom_call.1} parent=43 // pred_region
          %318 = dma.done %s311, 32
        $region52: #{tpu_custom_call.1} parent=43 // pred_fallthru
          _
        // Predicated region
        $region53: #{tpu_custom_call.1} parent=43 // pred_check
          %p319 = pneg %p96
        $region54: #{tpu_custom_call.1} parent=43 // pred_check_branch
          %321 = sbr.rel (%p319) target = $region56
        $region55: #{tpu_custom_call.1} parent=43 // pred_region
          %322 = dma.done [#allocation7], 3072
        $region56: #{tpu_custom_call.1} parent=43 // pred_fallthru
          _
        // Predicated region
        $region57: #{tpu_custom_call.1} parent=43 // pred_check
          %p323 = pneg %p117
        $region58: #{tpu_custom_call.1} parent=43 // pred_check_branch
          %325 = sbr.rel (%p323) target = $region60
        $region59: #{tpu_custom_call.1} parent=43 // pred_region
          %326 = dma.done [#allocation10], 48
        $region60: #{tpu_custom_call.1} parent=43 // pred_fallthru
          _
        // Predicated region
        $region61: #{tpu_custom_call.1} parent=43 // pred_check
          %p327 = pneg %p138
        $region62: #{tpu_custom_call.1} parent=43 // pred_check_branch
          %329 = sbr.rel (%p327) target = $region64
        $region63: #{tpu_custom_call.1} parent=43 // pred_region
          %330 = dma.done [#allocation10], 256
        $region64: #{tpu_custom_call.1} parent=43 // pred_fallthru
          _
        // Predicated region
        $region65: #{tpu_custom_call.1} parent=43 // pred_check
          %p331 = pneg %p159
        $region66: #{tpu_custom_call.1} parent=43 // pred_check_branch
          %333 = sbr.rel (%p331) target = $region68
        $region67: #{tpu_custom_call.1} parent=43 // pred_region
          %334 = dma.done [#allocation13], 16
        $region68: #{tpu_custom_call.1} parent=43 // pred_fallthru
          _
        %s335 = sand.u32 %s36, 1
        %s336 = scalar_lea.sflag [#allocation4], %s335
        %s337 = sand.u32 %s36, 1
        %s338 = smul.addr %s337, 8
        %s339 = scalar_lea.vmem [#allocation3], %s338
        %p340 = pneg %p49
        %p341 = pneg %p46
        %s342 = sand.u32 %s28, 1
        %s343 = scalar_lea.sflag [#allocation7], %s342
        %s344 = sand.u32 %s62, 1
        %s345 = smul.addr %s344, 2
        %s346 = scalar_lea.vmem [#allocation6], %s345
        %p347 = pneg %p75
        %p348 = pneg %p72
        %p349 = pneg %p96
        %p350 = pneg %p93
        %p351 = pneg %p117
        %p352 = pneg %p114
        %p353 = pneg %p138
        %p354 = pneg %p135
        %p355 = pneg %p159
        %p356 = pneg %p156
        %p357 = pneg %p185
        %p358 = pneg %p182
        %s359 = sand.u32 %s172, 1
        %s360 = scalar_lea.sflag [#allocation5], %s359
        %s361 = sand.u32 %s172, 1
        %s362 = smul.addr %s361, 16
        %s363 = scalar_lea.vmem [#allocation14], %s362
        %s364 = smul.u32 2, %s28
        %s365 = smul.u32 2, %s28
        %s366 = smul.u32 2, %s28
        %v368 = vld [vmem:[%s305] sm:$0xf]
        %v369 = vld [vmem:[%s305 + $0x4] sm:$0xf]
        %v370 = vld [vmem:[#allocation8] sm:$0xff]
        %v371 = vld [vmem:[#allocation8 + $0x8] sm:$0xf]
        %v372 = vld [vmem:[#allocation8 + $0xc] sm:$0xff]
        %v373 = vld [vmem:[#allocation8 + $0x14] sm:$0xf]
        %v374 = vld [vmem:[#allocation8 + $0x18] sm:$0xff]
        %v375 = vld [vmem:[#allocation8 + $0x20] sm:$0xf]
        %v376 = vld [vmem:[#allocation8 + $0x24] sm:$0xff]
        %v377 = vld [vmem:[#allocation8 + $0x2c] sm:$0xf]
        %v378 = vld [vmem:[#allocation8 + $0x30] sm:$0xff]
        %v379 = vld [vmem:[#allocation8 + $0x38] sm:$0xf]
        %v380 = vld [vmem:[#allocation8 + $0x3c] sm:$0xff]
        %v381 = vld [vmem:[#allocation8 + $0x44] sm:$0xf]
        %v382 = vld [vmem:[#allocation8 + $0x48] sm:$0xff]
        %v383 = vld [vmem:[#allocation8 + $0x50] sm:$0xf]
        %v384 = vld [vmem:[#allocation8 + $0x54] sm:$0xff]
        %v385 = vld [vmem:[#allocation8 + $0x5c] sm:$0xf]
        %v386 = vld [vmem:[#allocation8 + $0x60] sm:$0xff]
        %v387 = vld [vmem:[#allocation8 + $0x68] sm:$0xf]
        %v388 = vld [vmem:[#allocation8 + $0x6c] sm:$0xff]
        %v389 = vld [vmem:[#allocation8 + $0x74] sm:$0xf]
        %v390 = vld [vmem:[#allocation8 + $0x78] sm:$0xff]
        %v391 = vld [vmem:[#allocation8 + $0x80] sm:$0xf]
        %v392 = vld [vmem:[#allocation8 + $0x84] sm:$0xff]
        %v393 = vld [vmem:[#allocation8 + $0x8c] sm:$0xf]
        %v394 = vld [vmem:[#allocation8 + $0x90] sm:$0xff]
        %v395 = vld [vmem:[#allocation8 + $0x98] sm:$0xf]
        %v396 = vld [vmem:[#allocation8 + $0x9c] sm:$0xff]
        %v397 = vld [vmem:[#allocation8 + $0xa4] sm:$0xf]
        %v398 = vld [vmem:[#allocation8 + $0xa8] sm:$0xff]
        %v399 = vld [vmem:[#allocation8 + $0xb0] sm:$0xf]
        %v400 = vld [vmem:[#allocation8 + $0xb4] sm:$0xff]
        %v401 = vld [vmem:[#allocation8 + $0xbc] sm:$0xf]
        %v402 = vld [vmem:[#allocation9] sm:$0x7]
        %v404 = vlaneseq
        %v405 = vshrl.u32 %v404, 7
        %v406 = vsub.s32 0, %v405
        %v407 = vrot.slane %v402, %v406
        %v408 = vlaneseq
        %v409 = vshrl.u32 %v408, 7
        %v410 = vsub.s32 1, %v409
        %v411 = vrot.slane %v402, %v410
        %v412 = vlaneseq
        %v413 = vshrl.u32 %v412, 7
        %v414 = vsub.s32 2, %v413
        %v415 = vrot.slane %v402, %v414
        %v421 = vunpack.c.l.b16 %v368
        %v422 = vunpack.c.l.b16 %v369
        %v423 = vpack.c.b16 %v422, %v421
        %v457 = vunpack.c.l.b16 %v370
        %v458 = vunpack.c.h.b16 %v370
        %v459 = vunpack.c.l.b16 %v371
        %v460 = vunpack.c.l.b16 %v372
        %v461 = vunpack.c.h.b16 %v372
        %v462 = vunpack.c.l.b16 %v373
        %v463 = vunpack.c.l.b16 %v374
        %v464 = vunpack.c.h.b16 %v374
        %v465 = vunpack.c.l.b16 %v375
        %v466 = vunpack.c.l.b16 %v376
        %v467 = vunpack.c.h.b16 %v376
        %v468 = vunpack.c.l.b16 %v377
        %v469 = vunpack.c.l.b16 %v378
        %v470 = vunpack.c.h.b16 %v378
        %v471 = vunpack.c.l.b16 %v379
        %v472 = vunpack.c.l.b16 %v380
        %v473 = vunpack.c.h.b16 %v380
        %v474 = vunpack.c.l.b16 %v381
        %v475 = vunpack.c.l.b16 %v382
        %v476 = vunpack.c.h.b16 %v382
        %v477 = vunpack.c.l.b16 %v383
        %v478 = vunpack.c.l.b16 %v384
        %v479 = vunpack.c.h.b16 %v384
        %v480 = vunpack.c.l.b16 %v385
        %v481 = vunpack.c.l.b16 %v386
        %v482 = vunpack.c.h.b16 %v386
        %v483 = vunpack.c.l.b16 %v387
        %v484 = vunpack.c.l.b16 %v388
        %v485 = vunpack.c.h.b16 %v388
        %v486 = vunpack.c.l.b16 %v389
        %v487 = vunpack.c.l.b16 %v390
        %v488 = vunpack.c.h.b16 %v390
        %v489 = vunpack.c.l.b16 %v391
        %v490 = vunpack.c.l.b16 %v392
        %v491 = vunpack.c.h.b16 %v392
        %v492 = vunpack.c.l.b16 %v393
        %v493 = vunpack.c.l.b16 %v394
        %v494 = vunpack.c.h.b16 %v394
        %v495 = vunpack.c.l.b16 %v395
        %v496 = vunpack.c.l.b16 %v396
        %v497 = vunpack.c.h.b16 %v396
        %v498 = vunpack.c.l.b16 %v397
        %v499 = vunpack.c.l.b16 %v398
        %v500 = vunpack.c.h.b16 %v398
        %v501 = vunpack.c.l.b16 %v399
        %v502 = vunpack.c.l.b16 %v400
        %v503 = vunpack.c.h.b16 %v400
        %v504 = vunpack.c.l.b16 %v401
        %v505 = vpack.c.b16 %v460, %v457
        %v506 = vpack.c.b16 %v461, %v458
        %v507 = vpack.c.b16 %v462, %v459
        %v508 = vpack.c.b16 %v466, %v463
        %v509 = vpack.c.b16 %v467, %v464
        %v510 = vpack.c.b16 %v468, %v465
        %v511 = vpack.c.b16 %v472, %v469
        %v512 = vpack.c.b16 %v473, %v470
        %v513 = vpack.c.b16 %v474, %v471
        %v514 = vpack.c.b16 %v478, %v475
        %v515 = vpack.c.b16 %v479, %v476
        %v516 = vpack.c.b16 %v480, %v477
        %v517 = vpack.c.b16 %v484, %v481
        %v518 = vpack.c.b16 %v485, %v482
        %v519 = vpack.c.b16 %v486, %v483
        %v520 = vpack.c.b16 %v490, %v487
        %v521 = vpack.c.b16 %v491, %v488
        %v522 = vpack.c.b16 %v492, %v489
        %v523 = vpack.c.b16 %v496, %v493
        %v524 = vpack.c.b16 %v497, %v494
        %v525 = vpack.c.b16 %v498, %v495
        %v526 = vpack.c.b16 %v502, %v499
        %v527 = vpack.c.b16 %v503, %v500
        %v528 = vpack.c.b16 %v504, %v501
        %553 = vmatprep.subr.bf16.mxu0 %v506
        %554 = vmatpush1.bf16.msra.mxu0 %v505
        %555 = vmatprep.subr.bf16.mxu0 %v509
        %556 = vmatpush1.bf16.msra.mxu0 %v508
        %557 = vmatprep.subr.bf16.mxu0 %v512
        %558 = vmatpush1.bf16.msra.mxu0 %v511
        %559 = vmatprep.subr.bf16.mxu0 %v515
        %560 = vmatpush1.bf16.msra.mxu0 %v514
        %561 = vmatprep.subr.bf16.mxu0 %v518
        %562 = vmatpush1.bf16.msra.mxu0 %v517
        %563 = vmatprep.subr.bf16.mxu0 %v521
        %564 = vmatpush1.bf16.msra.mxu0 %v520
        %565 = vmatprep.subr.bf16.mxu0 %v524
        %566 = vmatpush1.bf16.msra.mxu0 %v523
        %567 = vmatprep.subr.bf16.mxu0 %v527
        %568 = vmatpush1.bf16.msra.mxu0 %v526
        %569 = vmatprep.subr.bf16.mxu0 0
        %570 = vmatpush1.bf16.msra.mxu0 0
        %571 = vmatprep.subr.bf16.mxu0 0
        %572 = vmatpush1.bf16.msra.mxu0 0
        %573 = vmatprep.subr.bf16.mxu0 0
        %574 = vmatpush1.bf16.msra.mxu0 0
        %575 = vmatprep.subr.bf16.mxu0 0
        %576 = vmatpush1.bf16.msra.mxu0 0
        %577 = vmatprep.subr.bf16.mxu0 0
        %578 = vmatpush1.bf16.msra.mxu0 0
        %579 = vmatprep.subr.bf16.mxu0 0
        %580 = vmatpush1.bf16.msra.mxu0 0
        %581 = vmatprep.subr.bf16.mxu0 0
        %582 = vmatpush1.bf16.msra.mxu0 0
        %583 = vmatprep.subr.bf16.mxu0 0
        %584 = vmatpush1.bf16.msra.mxu0 0
        %585 = vmatprep.mubr.bf16.mxu0 0
        %586 = vmatmul.mubr.bf16.gmra.mrb[0].mxu0 %v423
        %v587 = vpop.f32.mrb[0].mxu0
        %v588 = vadd.f32 %v407, %v587
        %v589 = vpop.f32.mrb[0].mxu0
        %v590 = vadd.f32 %v411, %v589
        %v591 = vpop.f32.mrb[0].mxu0
        %v592 = vadd.f32 %v407, %v591
        %v593 = vpop.f32.mrb[0].mxu0
        %v594 = vadd.f32 %v411, %v593
        %595 = vdwg.mxu0
        %596 = vmatprep.subr.bf16.mxu0 0
        %597 = vmatpush1.bf16.msra.mxu0 %v507
        %598 = vmatprep.subr.bf16.mxu0 0
        %599 = vmatpush1.bf16.msra.mxu0 %v510
        %600 = vmatprep.subr.bf16.mxu0 0
        %601 = vmatpush1.bf16.msra.mxu0 %v513
        %602 = vmatprep.subr.bf16.mxu0 0
        %603 = vmatpush1.bf16.msra.mxu0 %v516
        %604 = vmatprep.subr.bf16.mxu0 0
        %605 = vmatpush1.bf16.msra.mxu0 %v519
        %606 = vmatprep.subr.bf16.mxu0 0
        %607 = vmatpush1.bf16.msra.mxu0 %v522
        %608 = vmatprep.subr.bf16.mxu0 0
        %609 = vmatpush1.bf16.msra.mxu0 %v525
        %610 = vmatprep.subr.bf16.mxu0 0
        %611 = vmatpush1.bf16.msra.mxu0 %v528
        %612 = vmatprep.subr.bf16.mxu0 0
        %613 = vmatpush1.bf16.msra.mxu0 0
        %614 = vmatprep.subr.bf16.mxu0 0
        %615 = vmatpush1.bf16.msra.mxu0 0
        %616 = vmatprep.subr.bf16.mxu0 0
        %617 = vmatpush1.bf16.msra.mxu0 0
        %618 = vmatprep.subr.bf16.mxu0 0
        %619 = vmatpush1.bf16.msra.mxu0 0
        %620 = vmatprep.subr.bf16.mxu0 0
        %621 = vmatpush1.bf16.msra.mxu0 0
        %622 = vmatprep.subr.bf16.mxu0 0
        %623 = vmatpush1.bf16.msra.mxu0 0
        %624 = vmatprep.subr.bf16.mxu0 0
        %625 = vmatpush1.bf16.msra.mxu0 0
        %626 = vmatprep.subr.bf16.mxu0 0
        %627 = vmatpush1.bf16.msra.mxu0 0
        %628 = vmatprep.mubr.bf16.mxu0 0
        %629 = vmatmul.mubr.bf16.gmra.mrb[0].mxu0 %v423
        %v630 = vpop.f32.mrb[0].mxu0
        %v631 = vadd.f32 %v415, %v630
        %v632 = vpop.f32.mrb[0].mxu0
        %v633 = vpop.f32.mrb[0].mxu0
        %v634 = vadd.f32 %v415, %v633
        %v635 = vpop.f32.mrb[0].mxu0
        %636 = vdwg.mxu0
        %v637 = vpack.c.bf16 %v592, %v588
        %v638 = vpack.c.bf16 %v594, %v590
        %v639 = vpack.c.bf16 %v634, %v631
        %v640 = vld [vmem:[%s314] sm:$0x1]
        %v641 = vld [vmem:[%s314 + $0x1] sm:$0x1]
        %642 = vst [vmem:[#allocation2] sm:$0xff] 0.0
        %643 = vst [vmem:[#allocation2 + $0x8] sm:$0xff] 0.0
        %v645 = vunpack.c.l.b16 %v637
        %v646 = vunpack.c.h.b16 %v637
        %v647 = vpack.c.b16 %v645, %v645
        %v648 = vpack.c.b16 %v646, %v646
        %v650 = vunpack.c.l.b16 %v638
        %v651 = vunpack.c.h.b16 %v638
        %v652 = vpack.c.b16 %v650, %v650
        %v653 = vpack.c.b16 %v651, %v651
        %v655 = vunpack.c.l.b16 %v639
        %v656 = vunpack.c.h.b16 %v639
        %v657 = vpack.c.b16 %v655, %v655
        %v658 = vpack.c.b16 %v656, %v656
        %v661 = vlaneseq
        %v662 = vshrl.u32 %v661, 7
        %v663 = vsub.s32 0, %v662
        %v664 = vrot.slane %v640, %v663
        %v665 = vlaneseq
        %v666 = vshrl.u32 %v665, 7
        %v667 = vsub.s32 0, %v666
        %v668 = vrot.slane %v641, %v667
        %vm671 = vcmask 64512
        %v673 = vsel %vm671, %v647, 0
        %v676 = vsel %vm671, %v652, 0
        %678 = vmatprep.subr.bf16.mxu0 0
        %679 = vmatpush1.bf16.xpose.msra.mxu0 %v676
        %680 = vmatprep.subr.bf16.mxu0 0
        %681 = vmatpush1.bf16.xpose.msra.mxu0 0
        %682 = vmatprep.subr.bf16.mxu0 0
        %683 = vmatpush1.bf16.xpose.msra.mxu0 0
        %684 = vmatprep.subr.bf16.mxu0 0
        %685 = vmatpush1.bf16.xpose.msra.mxu0 0
        %686 = vmatprep.subr.bf16.mxu0 0
        %687 = vmatpush1.bf16.xpose.msra.mxu0 0
        %688 = vmatprep.subr.bf16.mxu0 0
        %689 = vmatpush1.bf16.xpose.msra.mxu0 0
        %690 = vmatprep.subr.bf16.mxu0 0
        %691 = vmatpush1.bf16.xpose.msra.mxu0 0
        %692 = vmatprep.subr.bf16.mxu0 0
        %693 = vmatpush1.bf16.xpose.msra.mxu0 0
        %694 = vmatprep.subr.bf16.mxu0 0
        %695 = vmatpush1.bf16.xpose.msra.mxu0 0
        %696 = vmatprep.subr.bf16.mxu0 0
        %697 = vmatpush1.bf16.xpose.msra.mxu0 0
        %698 = vmatprep.subr.bf16.mxu0 0
        %699 = vmatpush1.bf16.xpose.msra.mxu0 0
        %700 = vmatprep.subr.bf16.mxu0 0
        %701 = vmatpush1.bf16.xpose.msra.mxu0 0
        %702 = vmatprep.subr.bf16.mxu0 0
        %703 = vmatpush1.bf16.xpose.msra.mxu0 0
        %704 = vmatprep.subr.bf16.mxu0 0
        %705 = vmatpush1.bf16.xpose.msra.mxu0 0
        %706 = vmatprep.subr.bf16.mxu0 0
        %707 = vmatpush1.bf16.xpose.msra.mxu0 0
        %708 = vmatprep.subr.bf16.mxu0 0
        %709 = vmatpush1.bf16.xpose.msra.mxu0 0
        %710 = vmatprep.mubr.bf16.mxu0 0
        %711 = vmatmul.mubr.bf16.gmra.mrb[0].mxu0 %v673
        %v712 = vpop.f32.mrb[0].mxu0
        %v713 = vadd.f32 %v664, %v712
        %v714 = vpop.f32.mrb[0].mxu0
        %v715 = vpop.f32.mrb[0].mxu0
        %v716 = vpop.f32.mrb[0].mxu0
        %717 = vdwg.mxu0
        %v719 = vsel %vm671, %v648, 0
        %v722 = vsel %vm671, %v653, 0
        %724 = vmatprep.subr.bf16.mxu0 0
        %725 = vmatpush1.bf16.xpose.msra.mxu0 %v722
        %726 = vmatprep.subr.bf16.mxu0 0
        %727 = vmatpush1.bf16.xpose.msra.mxu0 0
        %728 = vmatprep.subr.bf16.mxu0 0
        %729 = vmatpush1.bf16.xpose.msra.mxu0 0
        %730 = vmatprep.subr.bf16.mxu0 0
        %731 = vmatpush1.bf16.xpose.msra.mxu0 0
        %732 = vmatprep.subr.bf16.mxu0 0
        %733 = vmatpush1.bf16.xpose.msra.mxu0 0
        %734 = vmatprep.subr.bf16.mxu0 0
        %735 = vmatpush1.bf16.xpose.msra.mxu0 0
        %736 = vmatprep.subr.bf16.mxu0 0
        %737 = vmatpush1.bf16.xpose.msra.mxu0 0
        %738 = vmatprep.subr.bf16.mxu0 0
        %739 = vmatpush1.bf16.xpose.msra.mxu0 0
        %740 = vmatprep.subr.bf16.mxu0 0
        %741 = vmatpush1.bf16.xpose.msra.mxu0 0
        %742 = vmatprep.subr.bf16.mxu0 0
        %743 = vmatpush1.bf16.xpose.msra.mxu0 0
        %744 = vmatprep.subr.bf16.mxu0 0
        %745 = vmatpush1.bf16.xpose.msra.mxu0 0
        %746 = vmatprep.subr.bf16.mxu0 0
        %747 = vmatpush1.bf16.xpose.msra.mxu0 0
        %748 = vmatprep.subr.bf16.mxu0 0
        %749 = vmatpush1.bf16.xpose.msra.mxu0 0
        %750 = vmatprep.subr.bf16.mxu0 0
        %751 = vmatpush1.bf16.xpose.msra.mxu0 0
        %752 = vmatprep.subr.bf16.mxu0 0
        %753 = vmatpush1.bf16.xpose.msra.mxu0 0
        %754 = vmatprep.subr.bf16.mxu0 0
        %755 = vmatpush1.bf16.xpose.msra.mxu0 0
        %756 = vmatprep.mubr.bf16.mxu0 0
        %757 = vmatmul.mubr.bf16.gmra.mrb[0].mxu0 %v719
        %v758 = vpop.f32.mrb[0].mxu0
        %v759 = vadd.f32 %v668, %v758
        %v760 = vpop.f32.mrb[0].mxu0
        %v761 = vpop.f32.mrb[0].mxu0
        %v762 = vpop.f32.mrb[0].mxu0
        %763 = vdwg.mxu0
        %v764 = vsel %vm671, %v713, -inf
        %765 = vmax.xlane.f32.xlu0 %v764
        %v766 = vpop.xlane.xlu0 %765
        %v767 = vsel %vm671, %v759, -inf
        %768 = vmax.xlane.f32.xlu0 %v767
        %v769 = vpop.xlane.xlu0 %768
        %v770 = vsub.f32 %v713, %v766
        %v771 = vsub.f32 %v759, %v769
        %v772 = vmul.f32 %v770, 1.442695
        %v773 = vpow.pop %v772
        %v774 = vmul.f32 %v771, 1.442695
        %v775 = vpow.pop %v774
        %v776 = vsel %vm671, %v773, 0.0
        %777 = vadd.xlane.f32.xlu0 %v776
        %v778 = vpop.xlane.xlu0 %777
        %v779 = vsel %vm671, %v775, 0.0
        %780 = vadd.xlane.f32.xlu0 %v779
        %v781 = vpop.xlane.xlu0 %780
        %v782 = vrcp.pop %v778
        %v783 = vrcp.pop %v781
        %v784 = vmul.f32 %v773, %v782
        %v785 = vmul.f32 %v775, %v783
        %v786 = vpack.c.bf16 %v784, %v784
        %v787 = vpack.c.bf16 %v785, %v785
        %v789 = vsel %vm671, %v786, 0
        %vm791 = vcmask 1043456
        %v793 = vsel %vm791, %v657, 0
        %795 = vmatprep.subr.bf16.mxu0 0
        %796 = vmatpush1.bf16.msra.mxu0 %v793
        %797 = vmatprep.subr.bf16.mxu0 0
        %798 = vmatpush1.bf16.msra.mxu0 0
        %799 = vmatprep.subr.bf16.mxu0 0
        %800 = vmatpush1.bf16.msra.mxu0 0
        %801 = vmatprep.subr.bf16.mxu0 0
        %802 = vmatpush1.bf16.msra.mxu0 0
        %803 = vmatprep.subr.bf16.mxu0 0
        %804 = vmatpush1.bf16.msra.mxu0 0
        %805 = vmatprep.subr.bf16.mxu0 0
        %806 = vmatpush1.bf16.msra.mxu0 0
        %807 = vmatprep.subr.bf16.mxu0 0
        %808 = vmatpush1.bf16.msra.mxu0 0
        %809 = vmatprep.subr.bf16.mxu0 0
        %810 = vmatpush1.bf16.msra.mxu0 0
        %811 = vmatprep.subr.bf16.mxu0 0
        %812 = vmatpush1.bf16.msra.mxu0 0
        %813 = vmatprep.subr.bf16.mxu0 0
        %814 = vmatpush1.bf16.msra.mxu0 0
        %815 = vmatprep.subr.bf16.mxu0 0
        %816 = vmatpush1.bf16.msra.mxu0 0
        %817 = vmatprep.subr.bf16.mxu0 0
        %818 = vmatpush1.bf16.msra.mxu0 0
        %819 = vmatprep.subr.bf16.mxu0 0
        %820 = vmatpush1.bf16.msra.mxu0 0
        %821 = vmatprep.subr.bf16.mxu0 0
        %822 = vmatpush1.bf16.msra.mxu0 0
        %823 = vmatprep.subr.bf16.mxu0 0
        %824 = vmatpush1.bf16.msra.mxu0 0
        %825 = vmatprep.subr.bf16.mxu0 0
        %826 = vmatpush1.bf16.msra.mxu0 0
        %827 = vmatprep.mubr.bf16.mxu0 0
        %828 = vmatmul.mubr.bf16.gmra.mrb[0].mxu0 %v789
        %v829 = vpop.f32.mrb[0].mxu0
        %v830 = vadd.f32 0.0, %v829
        %v831 = vpop.f32.mrb[0].mxu0
        %v832 = vpop.f32.mrb[0].mxu0
        %v833 = vpop.f32.mrb[0].mxu0
        %834 = vdwg.mxu0
        %v836 = vsel %vm671, %v787, 0
        %v839 = vsel %vm791, %v658, 0
        %841 = vmatprep.subr.bf16.mxu0 0
        %842 = vmatpush1.bf16.msra.mxu0 %v839
        %843 = vmatprep.subr.bf16.mxu0 0
        %844 = vmatpush1.bf16.msra.mxu0 0
        %845 = vmatprep.subr.bf16.mxu0 0
        %846 = vmatpush1.bf16.msra.mxu0 0
        %847 = vmatprep.subr.bf16.mxu0 0
        %848 = vmatpush1.bf16.msra.mxu0 0
        %849 = vmatprep.subr.bf16.mxu0 0
        %850 = vmatpush1.bf16.msra.mxu0 0
        %851 = vmatprep.subr.bf16.mxu0 0
        %852 = vmatpush1.bf16.msra.mxu0 0
        %853 = vmatprep.subr.bf16.mxu0 0
        %854 = vmatpush1.bf16.msra.mxu0 0
        %855 = vmatprep.subr.bf16.mxu0 0
        %856 = vmatpush1.bf16.msra.mxu0 0
        %857 = vmatprep.subr.bf16.mxu0 0
        %858 = vmatpush1.bf16.msra.mxu0 0
        %859 = vmatprep.subr.bf16.mxu0 0
        %860 = vmatpush1.bf16.msra.mxu0 0
        %861 = vmatprep.subr.bf16.mxu0 0
        %862 = vmatpush1.bf16.msra.mxu0 0
        %863 = vmatprep.subr.bf16.mxu0 0
        %864 = vmatpush1.bf16.msra.mxu0 0
        %865 = vmatprep.subr.bf16.mxu0 0
        %866 = vmatpush1.bf16.msra.mxu0 0
        %867 = vmatprep.subr.bf16.mxu0 0
        %868 = vmatpush1.bf16.msra.mxu0 0
        %869 = vmatprep.subr.bf16.mxu0 0
        %870 = vmatpush1.bf16.msra.mxu0 0
        %871 = vmatprep.subr.bf16.mxu0 0
        %872 = vmatpush1.bf16.msra.mxu0 0
        %873 = vmatprep.mubr.bf16.mxu0 0
        %874 = vmatmul.mubr.bf16.gmra.mrb[0].mxu0 %v836
        %v875 = vpop.f32.mrb[0].mxu0
        %v876 = vadd.f32 0.0, %v875
        %v877 = vpop.f32.mrb[0].mxu0
        %v878 = vpop.f32.mrb[0].mxu0
        %v879 = vpop.f32.mrb[0].mxu0
        %880 = vdwg.mxu0
        %v881 = vld [vmem:[#allocation2] sm:$0xff]
        %v882 = vld [vmem:[#allocation2 + $0x8] sm:$0xff]
        %v883 = vpack.c.bf16 %v876, %v830
        %v884 = vld [vmem:[#allocation11] sm:$0xf]
        %v886 = vsel %vm671, %v883, 0
        %v889 = vsel %vm791, %v884, 0
        %891 = vmatprep.subr.bf16.mxu0 0
        %892 = vmatpush1.bf16.msra.mxu0 %v889
        %893 = vmatprep.subr.bf16.mxu0 0
        %894 = vmatpush1.bf16.msra.mxu0 0
        %895 = vmatprep.subr.bf16.mxu0 0
        %896 = vmatpush1.bf16.msra.mxu0 0
        %897 = vmatprep.subr.bf16.mxu0 0
        %898 = vmatpush1.bf16.msra.mxu0 0
        %899 = vmatprep.subr.bf16.mxu0 0
        %900 = vmatpush1.bf16.msra.mxu0 0
        %901 = vmatprep.subr.bf16.mxu0 0
        %902 = vmatpush1.bf16.msra.mxu0 0
        %903 = vmatprep.subr.bf16.mxu0 0
        %904 = vmatpush1.bf16.msra.mxu0 0
        %905 = vmatprep.subr.bf16.mxu0 0
        %906 = vmatpush1.bf16.msra.mxu0 0
        %907 = vmatprep.subr.bf16.mxu0 0
        %908 = vmatpush1.bf16.msra.mxu0 0
        %909 = vmatprep.subr.bf16.mxu0 0
        %910 = vmatpush1.bf16.msra.mxu0 0
        %911 = vmatprep.subr.bf16.mxu0 0
        %912 = vmatpush1.bf16.msra.mxu0 0
        %913 = vmatprep.subr.bf16.mxu0 0
        %914 = vmatpush1.bf16.msra.mxu0 0
        %915 = vmatprep.subr.bf16.mxu0 0
        %916 = vmatpush1.bf16.msra.mxu0 0
        %917 = vmatprep.subr.bf16.mxu0 0
        %918 = vmatpush1.bf16.msra.mxu0 0
        %919 = vmatprep.subr.bf16.mxu0 0
        %920 = vmatpush1.bf16.msra.mxu0 0
        %921 = vmatprep.subr.bf16.mxu0 0
        %922 = vmatpush1.bf16.msra.mxu0 0
        %923 = vmatprep.mubr.bf16.mxu0 0
        %924 = vmatmul.mubr.bf16.gmra.mrb[0].mxu0 %v886
        %v925 = vpop.f32.mrb[0].mxu0
        %v926 = vadd.f32 0.0, %v925
        %v927 = vpop.f32.mrb[0].mxu0
        %v928 = vpop.f32.mrb[0].mxu0
        %v929 = vadd.f32 0.0, %v928
        %v930 = vpop.f32.mrb[0].mxu0
        %931 = vdwg.mxu0
        %v932 = vadd.f32 %v881, %v926
        %v933 = vadd.f32 %v882, %v929
        %934 = vst [vmem:[#allocation2] sm:$0xff] %v932
        %935 = vst [vmem:[#allocation2 + $0x8] sm:$0xff] %v933
        %936 = vrot.lane.b32.xlu0 %v647, 120
        %v937 = vpop.permute.xlu0 %936
        %938 = vrot.lane.b32.xlu0 %v652, 120
        %v939 = vpop.permute.xlu0 %938
        %v941 = vsel %vm671, %v937, 0
        %v944 = vsel %vm671, %v939, 0
        %946 = vmatprep.subr.bf16.mxu0 0
        %947 = vmatpush1.bf16.xpose.msra.mxu0 %v944
        %948 = vmatprep.subr.bf16.mxu0 0
        %949 = vmatpush1.bf16.xpose.msra.mxu0 0
        %950 = vmatprep.subr.bf16.mxu0 0
        %951 = vmatpush1.bf16.xpose.msra.mxu0 0
        %952 = vmatprep.subr.bf16.mxu0 0
        %953 = vmatpush1.bf16.xpose.msra.mxu0 0
        %954 = vmatprep.subr.bf16.mxu0 0
        %955 = vmatpush1.bf16.xpose.msra.mxu0 0
        %956 = vmatprep.subr.bf16.mxu0 0
        %957 = vmatpush1.bf16.xpose.msra.mxu0 0
        %958 = vmatprep.subr.bf16.mxu0 0
        %959 = vmatpush1.bf16.xpose.msra.mxu0 0
        %960 = vmatprep.subr.bf16.mxu0 0
        %961 = vmatpush1.bf16.xpose.msra.mxu0 0
        %962 = vmatprep.subr.bf16.mxu0 0
        %963 = vmatpush1.bf16.xpose.msra.mxu0 0
        %964 = vmatprep.subr.bf16.mxu0 0
        %965 = vmatpush1.bf16.xpose.msra.mxu0 0
        %966 = vmatprep.subr.bf16.mxu0 0
        %967 = vmatpush1.bf16.xpose.msra.mxu0 0
        %968 = vmatprep.subr.bf16.mxu0 0
        %969 = vmatpush1.bf16.xpose.msra.mxu0 0
        %970 = vmatprep.subr.bf16.mxu0 0
        %971 = vmatpush1.bf16.xpose.msra.mxu0 0
        %972 = vmatprep.subr.bf16.mxu0 0
        %973 = vmatpush1.bf16.xpose.msra.mxu0 0
        %974 = vmatprep.subr.bf16.mxu0 0
        %975 = vmatpush1.bf16.xpose.msra.mxu0 0
        %976 = vmatprep.subr.bf16.mxu0 0
        %977 = vmatpush1.bf16.xpose.msra.mxu0 0
        %978 = vmatprep.mubr.bf16.mxu0 0
        %979 = vmatmul.mubr.bf16.gmra.mrb[0].mxu0 %v941
        %v980 = vpop.f32.mrb[0].mxu0
        %v981 = vadd.f32 %v664, %v980
        %v982 = vpop.f32.mrb[0].mxu0
        %v983 = vpop.f32.mrb[0].mxu0
        %v984 = vpop.f32.mrb[0].mxu0
        %985 = vdwg.mxu0
        %986 = vrot.lane.b32.xlu0 %v648, 120
        %v987 = vpop.permute.xlu0 %986
        %988 = vrot.lane.b32.xlu0 %v653, 120
        %v989 = vpop.permute.xlu0 %988
        %v991 = vsel %vm671, %v987, 0
        %v994 = vsel %vm671, %v989, 0
        %996 = vmatprep.subr.bf16.mxu0 0
        %997 = vmatpush1.bf16.xpose.msra.mxu0 %v994
        %998 = vmatprep.subr.bf16.mxu0 0
        %999 = vmatpush1.bf16.xpose.msra.mxu0 0
        %1000 = vmatprep.subr.bf16.mxu0 0
        %1001 = vmatpush1.bf16.xpose.msra.mxu0 0
        %1002 = vmatprep.subr.bf16.mxu0 0
        %1003 = vmatpush1.bf16.xpose.msra.mxu0 0
        %1004 = vmatprep.subr.bf16.mxu0 0
        %1005 = vmatpush1.bf16.xpose.msra.mxu0 0
        %1006 = vmatprep.subr.bf16.mxu0 0
        %1007 = vmatpush1.bf16.xpose.msra.mxu0 0
        %1008 = vmatprep.subr.bf16.mxu0 0
        %1009 = vmatpush1.bf16.xpose.msra.mxu0 0
        %1010 = vmatprep.subr.bf16.mxu0 0
        %1011 = vmatpush1.bf16.xpose.msra.mxu0 0
        %1012 = vmatprep.subr.bf16.mxu0 0
        %1013 = vmatpush1.bf16.xpose.msra.mxu0 0
        %1014 = vmatprep.subr.bf16.mxu0 0
        %1015 = vmatpush1.bf16.xpose.msra.mxu0 0
        %1016 = vmatprep.subr.bf16.mxu0 0
        %1017 = vmatpush1.bf16.xpose.msra.mxu0 0
        %1018 = vmatprep.subr.bf16.mxu0 0
        %1019 = vmatpush1.bf16.xpose.msra.mxu0 0
        %1020 = vmatprep.subr.bf16.mxu0 0
        %1021 = vmatpush1.bf16.xpose.msra.mxu0 0
        %1022 = vmatprep.subr.bf16.mxu0 0
        %1023 = vmatpush1.bf16.xpose.msra.mxu0 0
        %1024 = vmatprep.subr.bf16.mxu0 0
        %1025 = vmatpush1.bf16.xpose.msra.mxu0 0
        %1026 = vmatprep.subr.bf16.mxu0 0
        %1027 = vmatpush1.bf16.xpose.msra.mxu0 0
        %1028 = vmatprep.mubr.bf16.mxu0 0
        %1029 = vmatmul.mubr.bf16.gmra.mrb[0].mxu0 %v991
        %v1030 = vpop.f32.mrb[0].mxu0
        %v1031 = vadd.f32 %v668, %v1030
        %v1032 = vpop.f32.mrb[0].mxu0
        %v1033 = vpop.f32.mrb[0].mxu0
        %v1034 = vpop.f32.mrb[0].mxu0
        %1035 = vdwg.mxu0
        %v1036 = vsel %vm671, %v981, -inf
        %1037 = vmax.xlane.f32.xlu0 %v1036
        %v1038 = vpop.xlane.xlu0 %1037
        %v1039 = vsel %vm671, %v1031, -inf
        %1040 = vmax.xlane.f32.xlu0 %v1039
        %v1041 = vpop.xlane.xlu0 %1040
        %v1042 = vsub.f32 %v981, %v1038
        %v1043 = vsub.f32 %v1031, %v1041
        %v1044 = vmul.f32 %v1042, 1.442695
        %v1045 = vpow.pop %v1044
        %v1046 = vmul.f32 %v1043, 1.442695
        %v1047 = vpow.pop %v1046
        %v1048 = vsel %vm671, %v1045, 0.0
        %1049 = vadd.xlane.f32.xlu0 %v1048
        %v1050 = vpop.xlane.xlu0 %1049
        %v1051 = vsel %vm671, %v1047, 0.0
        %1052 = vadd.xlane.f32.xlu0 %v1051
        %v1053 = vpop.xlane.xlu0 %1052
        %v1054 = vrcp.pop %v1050
        %v1055 = vrcp.pop %v1053
        %v1056 = vmul.f32 %v1045, %v1054
        %v1057 = vmul.f32 %v1047, %v1055
        %v1058 = vpack.c.bf16 %v1056, %v1056
        %v1059 = vpack.c.bf16 %v1057, %v1057
        %1060 = vrot.lane.b32.xlu0 %v657, 120
        %v1061 = vpop.permute.xlu0 %1060
        %v1063 = vsel %vm671, %v1058, 0
        %v1066 = vsel %vm791, %v1061, 0
        %1068 = vmatprep.subr.bf16.mxu0 0
        %1069 = vmatpush1.bf16.msra.mxu0 %v1066
        %1070 = vmatprep.subr.bf16.mxu0 0
        %1071 = vmatpush1.bf16.msra.mxu0 0
        %1072 = vmatprep.subr.bf16.mxu0 0
        %1073 = vmatpush1.bf16.msra.mxu0 0
        %1074 = vmatprep.subr.bf16.mxu0 0
        %1075 = vmatpush1.bf16.msra.mxu0 0
        %1076 = vmatprep.subr.bf16.mxu0 0
        %1077 = vmatpush1.bf16.msra.mxu0 0
        %1078 = vmatprep.subr.bf16.mxu0 0
        %1079 = vmatpush1.bf16.msra.mxu0 0
        %1080 = vmatprep.subr.bf16.mxu0 0
        %1081 = vmatpush1.bf16.msra.mxu0 0
        %1082 = vmatprep.subr.bf16.mxu0 0
        %1083 = vmatpush1.bf16.msra.mxu0 0
        %1084 = vmatprep.subr.bf16.mxu0 0
        %1085 = vmatpush1.bf16.msra.mxu0 0
        %1086 = vmatprep.subr.bf16.mxu0 0
        %1087 = vmatpush1.bf16.msra.mxu0 0
        %1088 = vmatprep.subr.bf16.mxu0 0
        %1089 = vmatpush1.bf16.msra.mxu0 0
        %1090 = vmatprep.subr.bf16.mxu0 0
        %1091 = vmatpush1.bf16.msra.mxu0 0
        %1092 = vmatprep.subr.bf16.mxu0 0
        %1093 = vmatpush1.bf16.msra.mxu0 0
        %1094 = vmatprep.subr.bf16.mxu0 0
        %1095 = vmatpush1.bf16.msra.mxu0 0
        %1096 = vmatprep.subr.bf16.mxu0 0
        %1097 = vmatpush1.bf16.msra.mxu0 0
        %1098 = vmatprep.subr.bf16.mxu0 0
        %1099 = vmatpush1.bf16.msra.mxu0 0
        %1100 = vmatprep.mubr.bf16.mxu0 0
        %1101 = vmatmul.mubr.bf16.gmra.mrb[0].mxu0 %v1063
        %v1102 = vpop.f32.mrb[0].mxu0
        %v1103 = vadd.f32 0.0, %v1102
        %v1104 = vpop.f32.mrb[0].mxu0
        %v1105 = vpop.f32.mrb[0].mxu0
        %v1106 = vpop.f32.mrb[0].mxu0
        %1107 = vdwg.mxu0
        %1108 = vrot.lane.b32.xlu0 %v658, 120
        %v1109 = vpop.permute.xlu0 %1108
        %v1111 = vsel %vm671, %v1059, 0
        %v1114 = vsel %vm791, %v1109, 0
        %1116 = vmatprep.subr.bf16.mxu0 0
        %1117 = vmatpush1.bf16.msra.mxu0 %v1114
        %1118 = vmatprep.subr.bf16.mxu0 0
        %1119 = vmatpush1.bf16.msra.mxu0 0
        %1120 = vmatprep.subr.bf16.mxu0 0
        %1121 = vmatpush1.bf16.msra.mxu0 0
        %1122 = vmatprep.subr.bf16.mxu0 0
        %1123 = vmatpush1.bf16.msra.mxu0 0
        %1124 = vmatprep.subr.bf16.mxu0 0
        %1125 = vmatpush1.bf16.msra.mxu0 0
        %1126 = vmatprep.subr.bf16.mxu0 0
        %1127 = vmatpush1.bf16.msra.mxu0 0
        %1128 = vmatprep.subr.bf16.mxu0 0
        %1129 = vmatpush1.bf16.msra.mxu0 0
        %1130 = vmatprep.subr.bf16.mxu0 0
        %1131 = vmatpush1.bf16.msra.mxu0 0
        %1132 = vmatprep.subr.bf16.mxu0 0
        %1133 = vmatpush1.bf16.msra.mxu0 0
        %1134 = vmatprep.subr.bf16.mxu0 0
        %1135 = vmatpush1.bf16.msra.mxu0 0
        %1136 = vmatprep.subr.bf16.mxu0 0
        %1137 = vmatpush1.bf16.msra.mxu0 0
        %1138 = vmatprep.subr.bf16.mxu0 0
        %1139 = vmatpush1.bf16.msra.mxu0 0
        %1140 = vmatprep.subr.bf16.mxu0 0
        %1141 = vmatpush1.bf16.msra.mxu0 0
        %1142 = vmatprep.subr.bf16.mxu0 0
        %1143 = vmatpush1.bf16.msra.mxu0 0
        %1144 = vmatprep.subr.bf16.mxu0 0
        %1145 = vmatpush1.bf16.msra.mxu0 0
        %1146 = vmatprep.subr.bf16.mxu0 0
        %1147 = vmatpush1.bf16.msra.mxu0 0
        %1148 = vmatprep.mubr.bf16.mxu0 0
        %1149 = vmatmul.mubr.bf16.gmra.mrb[0].mxu0 %v1111
        %v1150 = vpop.f32.mrb[0].mxu0
        %v1151 = vadd.f32 0.0, %v1150
        %v1152 = vpop.f32.mrb[0].mxu0
        %v1153 = vpop.f32.mrb[0].mxu0
        %v1154 = vpop.f32.mrb[0].mxu0
        %1155 = vdwg.mxu0
        %v1156 = vld [vmem:[#allocation2] sm:$0xff]
        %v1157 = vld [vmem:[#allocation2 + $0x8] sm:$0xff]
        %v1158 = vpack.c.bf16 %v1151, %v1103
        %s1159 = scalar_lea.vmem [#allocation11], 4
        %v1160 = vld [vmem:[%s1159] sm:$0xf]
        %v1162 = vsel %vm671, %v1158, 0
        %v1165 = vsel %vm791, %v1160, 0
        %1167 = vmatprep.subr.bf16.mxu0 0
        %1168 = vmatpush1.bf16.msra.mxu0 %v1165
        %1169 = vmatprep.subr.bf16.mxu0 0
        %1170 = vmatpush1.bf16.msra.mxu0 0
        %1171 = vmatprep.subr.bf16.mxu0 0
        %1172 = vmatpush1.bf16.msra.mxu0 0
        %1173 = vmatprep.subr.bf16.mxu0 0
        %1174 = vmatpush1.bf16.msra.mxu0 0
        %1175 = vmatprep.subr.bf16.mxu0 0
        %1176 = vmatpush1.bf16.msra.mxu0 0
        %1177 = vmatprep.subr.bf16.mxu0 0
        %1178 = vmatpush1.bf16.msra.mxu0 0
        %1179 = vmatprep.subr.bf16.mxu0 0
        %1180 = vmatpush1.bf16.msra.mxu0 0
        %1181 = vmatprep.subr.bf16.mxu0 0
        %1182 = vmatpush1.bf16.msra.mxu0 0
        %1183 = vmatprep.subr.bf16.mxu0 0
        %1184 = vmatpush1.bf16.msra.mxu0 0
        %1185 = vmatprep.subr.bf16.mxu0 0
        %1186 = vmatpush1.bf16.msra.mxu0 0
        %1187 = vmatprep.subr.bf16.mxu0 0
        %1188 = vmatpush1.bf16.msra.mxu0 0
        %1189 = vmatprep.subr.bf16.mxu0 0
        %1190 = vmatpush1.bf16.msra.mxu0 0
        %1191 = vmatprep.subr.bf16.mxu0 0
        %1192 = vmatpush1.bf16.msra.mxu0 0
        %1193 = vmatprep.subr.bf16.mxu0 0
        %1194 = vmatpush1.bf16.msra.mxu0 0
        %1195 = vmatprep.subr.bf16.mxu0 0
        %1196 = vmatpush1.bf16.msra.mxu0 0
        %1197 = vmatprep.subr.bf16.mxu0 0
        %1198 = vmatpush1.bf16.msra.mxu0 0
        %1199 = vmatprep.mubr.bf16.mxu0 0
        %1200 = vmatmul.mubr.bf16.gmra.mrb[0].mxu0 %v1162
        %v1201 = vpop.f32.mrb[0].mxu0
        %v1202 = vadd.f32 0.0, %v1201
        %v1203 = vpop.f32.mrb[0].mxu0
        %v1204 = vpop.f32.mrb[0].mxu0
        %v1205 = vadd.f32 0.0, %v1204
        %v1206 = vpop.f32.mrb[0].mxu0
        %1207 = vdwg.mxu0
        %v1208 = vadd.f32 %v1156, %v1202
        %v1209 = vadd.f32 %v1157, %v1205
        %1210 = vst [vmem:[#allocation2] sm:$0xff] %v1208
        %1211 = vst [vmem:[#allocation2 + $0x8] sm:$0xff] %v1209
        %1212 = vrot.lane.b32.xlu0 %v647, 112
        %v1213 = vpop.permute.xlu0 %1212
        %1214 = vrot.lane.b32.xlu0 %v652, 112
        %v1215 = vpop.permute.xlu0 %1214
        %v1217 = vsel %vm671, %v1213, 0
        %v1220 = vsel %vm671, %v1215, 0
        %1222 = vmatprep.subr.bf16.mxu0 0
        %1223 = vmatpush1.bf16.xpose.msra.mxu0 %v1220
        %1224 = vmatprep.subr.bf16.mxu0 0
        %1225 = vmatpush1.bf16.xpose.msra.mxu0 0
        %1226 = vmatprep.subr.bf16.mxu0 0
        %1227 = vmatpush1.bf16.xpose.msra.mxu0 0
        %1228 = vmatprep.subr.bf16.mxu0 0
        %1229 = vmatpush1.bf16.xpose.msra.mxu0 0
        %1230 = vmatprep.subr.bf16.mxu0 0
        %1231 = vmatpush1.bf16.xpose.msra.mxu0 0
        %1232 = vmatprep.subr.bf16.mxu0 0
        %1233 = vmatpush1.bf16.xpose.msra.mxu0 0
        %1234 = vmatprep.subr.bf16.mxu0 0
        %1235 = vmatpush1.bf16.xpose.msra.mxu0 0
        %1236 = vmatprep.subr.bf16.mxu0 0
        %1237 = vmatpush1.bf16.xpose.msra.mxu0 0
        %1238 = vmatprep.subr.bf16.mxu0 0
        %1239 = vmatpush1.bf16.xpose.msra.mxu0 0
        %1240 = vmatprep.subr.bf16.mxu0 0
        %1241 = vmatpush1.bf16.xpose.msra.mxu0 0
        %1242 = vmatprep.subr.bf16.mxu0 0
        %1243 = vmatpush1.bf16.xpose.msra.mxu0 0
        %1244 = vmatprep.subr.bf16.mxu0 0
        %1245 = vmatpush1.bf16.xpose.msra.mxu0 0
        %1246 = vmatprep.subr.bf16.mxu0 0
        %1247 = vmatpush1.bf16.xpose.msra.mxu0 0
        %1248 = vmatprep.subr.bf16.mxu0 0
        %1249 = vmatpush1.bf16.xpose.msra.mxu0 0
        %1250 = vmatprep.subr.bf16.mxu0 0
        %1251 = vmatpush1.bf16.xpose.msra.mxu0 0
        %1252 = vmatprep.subr.bf16.mxu0 0
        %1253 = vmatpush1.bf16.xpose.msra.mxu0 0
        %1254 = vmatprep.mubr.bf16.mxu0 0
        %1255 = vmatmul.mubr.bf16.gmra.mrb[0].mxu0 %v1217
        %v1256 = vpop.f32.mrb[0].mxu0
        %v1257 = vadd.f32 %v664, %v1256
        %v1258 = vpop.f32.mrb[0].mxu0
        %v1259 = vpop.f32.mrb[0].mxu0
        %v1260 = vpop.f32.mrb[0].mxu0
        %1261 = vdwg.mxu0
        %1262 = vrot.lane.b32.xlu0 %v648, 112
        %v1263 = vpop.permute.xlu0 %1262
        %1264 = vrot.lane.b32.xlu0 %v653, 112
        %v1265 = vpop.permute.xlu0 %1264
        %v1267 = vsel %vm671, %v1263, 0
        %v1270 = vsel %vm671, %v1265, 0
        %1272 = vmatprep.subr.bf16.mxu0 0
        %1273 = vmatpush1.bf16.xpose.msra.mxu0 %v1270
        %1274 = vmatprep.subr.bf16.mxu0 0
        %1275 = vmatpush1.bf16.xpose.msra.mxu0 0
        %1276 = vmatprep.subr.bf16.mxu0 0
        %1277 = vmatpush1.bf16.xpose.msra.mxu0 0
        %1278 = vmatprep.subr.bf16.mxu0 0
        %1279 = vmatpush1.bf16.xpose.msra.mxu0 0
        %1280 = vmatprep.subr.bf16.mxu0 0
        %1281 = vmatpush1.bf16.xpose.msra.mxu0 0
        %1282 = vmatprep.subr.bf16.mxu0 0
        %1283 = vmatpush1.bf16.xpose.msra.mxu0 0
        %1284 = vmatprep.subr.bf16.mxu0 0
        %1285 = vmatpush1.bf16.xpose.msra.mxu0 0
        %1286 = vmatprep.subr.bf16.mxu0 0
        %1287 = vmatpush1.bf16.xpose.msra.mxu0 0
        %1288 = vmatprep.subr.bf16.mxu0 0
        %1289 = vmatpush1.bf16.xpose.msra.mxu0 0
        %1290 = vmatprep.subr.bf16.mxu0 0
        %1291 = vmatpush1.bf16.xpose.msra.mxu0 0
        %1292 = vmatprep.subr.bf16.mxu0 0
        %1293 = vmatpush1.bf16.xpose.msra.mxu0 0
        %1294 = vmatprep.subr.bf16.mxu0 0
        %1295 = vmatpush1.bf16.xpose.msra.mxu0 0
        %1296 = vmatprep.subr.bf16.mxu0 0
        %1297 = vmatpush1.bf16.xpose.msra.mxu0 0
        %1298 = vmatprep.subr.bf16.mxu0 0
        %1299 = vmatpush1.bf16.xpose.msra.mxu0 0
        %1300 = vmatprep.subr.bf16.mxu0 0
        %1301 = vmatpush1.bf16.xpose.msra.mxu0 0
        %1302 = vmatprep.subr.bf16.mxu0 0
        %1303 = vmatpush1.bf16.xpose.msra.mxu0 0
        %1304 = vmatprep.mubr.bf16.mxu0 0
        %1305 = vmatmul.mubr.bf16.gmra.mrb[0].mxu0 %v1267
        %v1306 = vpop.f32.mrb[0].mxu0
        %v1307 = vadd.f32 %v668, %v1306
        %v1308 = vpop.f32.mrb[0].mxu0
        %v1309 = vpop.f32.mrb[0].mxu0
        %v1310 = vpop.f32.mrb[0].mxu0
        %1311 = vdwg.mxu0
        %v1312 = vsel %vm671, %v1257, -inf
        %1313 = vmax.xlane.f32.xlu0 %v1312
        %v1314 = vpop.xlane.xlu0 %1313
        %v1315 = vsel %vm671, %v1307, -inf
        %1316 = vmax.xlane.f32.xlu0 %v1315
        %v1317 = vpop.xlane.xlu0 %1316
        %v1318 = vsub.f32 %v1257, %v1314
        %v1319 = vsub.f32 %v1307, %v1317
        %v1320 = vmul.f32 %v1318, 1.442695
        %v1321 = vpow.pop %v1320
        %v1322 = vmul.f32 %v1319, 1.442695
        %v1323 = vpow.pop %v1322
        %v1324 = vsel %vm671, %v1321, 0.0
        %1325 = vadd.xlane.f32.xlu0 %v1324
        %v1326 = vpop.xlane.xlu0 %1325
        %v1327 = vsel %vm671, %v1323, 0.0
        %1328 = vadd.xlane.f32.xlu0 %v1327
        %v1329 = vpop.xlane.xlu0 %1328
        %v1330 = vrcp.pop %v1326
        %v1331 = vrcp.pop %v1329
        %v1332 = vmul.f32 %v1321, %v1330
        %v1333 = vmul.f32 %v1323, %v1331
        %v1334 = vpack.c.bf16 %v1332, %v1332
        %v1335 = vpack.c.bf16 %v1333, %v1333
        %1336 = vrot.lane.b32.xlu0 %v657, 112
        %v1337 = vpop.permute.xlu0 %1336
        %v1339 = vsel %vm671, %v1334, 0
        %v1342 = vsel %vm791, %v1337, 0
        %1344 = vmatprep.subr.bf16.mxu0 0
        %1345 = vmatpush1.bf16.msra.mxu0 %v1342
        %1346 = vmatprep.subr.bf16.mxu0 0
        %1347 = vmatpush1.bf16.msra.mxu0 0
        %1348 = vmatprep.subr.bf16.mxu0 0
        %1349 = vmatpush1.bf16.msra.mxu0 0
        %1350 = vmatprep.subr.bf16.mxu0 0
        %1351 = vmatpush1.bf16.msra.mxu0 0
        %1352 = vmatprep.subr.bf16.mxu0 0
        %1353 = vmatpush1.bf16.msra.mxu0 0
        %1354 = vmatprep.subr.bf16.mxu0 0
        %1355 = vmatpush1.bf16.msra.mxu0 0
        %1356 = vmatprep.subr.bf16.mxu0 0
        %1357 = vmatpush1.bf16.msra.mxu0 0
        %1358 = vmatprep.subr.bf16.mxu0 0
        %1359 = vmatpush1.bf16.msra.mxu0 0
        %1360 = vmatprep.subr.bf16.mxu0 0
        %1361 = vmatpush1.bf16.msra.mxu0 0
        %1362 = vmatprep.subr.bf16.mxu0 0
        %1363 = vmatpush1.bf16.msra.mxu0 0
        %1364 = vmatprep.subr.bf16.mxu0 0
        %1365 = vmatpush1.bf16.msra.mxu0 0
        %1366 = vmatprep.subr.bf16.mxu0 0
        %1367 = vmatpush1.bf16.msra.mxu0 0
        %1368 = vmatprep.subr.bf16.mxu0 0
        %1369 = vmatpush1.bf16.msra.mxu0 0
        %1370 = vmatprep.subr.bf16.mxu0 0
        %1371 = vmatpush1.bf16.msra.mxu0 0
        %1372 = vmatprep.subr.bf16.mxu0 0
        %1373 = vmatpush1.bf16.msra.mxu0 0
        %1374 = vmatprep.subr.bf16.mxu0 0
        %1375 = vmatpush1.bf16.msra.mxu0 0
        %1376 = vmatprep.mubr.bf16.mxu0 0
        %1377 = vmatmul.mubr.bf16.gmra.mrb[0].mxu0 %v1339
        %v1378 = vpop.f32.mrb[0].mxu0
        %v1379 = vadd.f32 0.0, %v1378
        %v1380 = vpop.f32.mrb[0].mxu0
        %v1381 = vpop.f32.mrb[0].mxu0
        %v1382 = vpop.f32.mrb[0].mxu0
        %1383 = vdwg.mxu0
        %1384 = vrot.lane.b32.xlu0 %v658, 112
        %v1385 = vpop.permute.xlu0 %1384
        %v1387 = vsel %vm671, %v1335, 0
        %v1390 = vsel %vm791, %v1385, 0
        %1392 = vmatprep.subr.bf16.mxu0 0
        %1393 = vmatpush1.bf16.msra.mxu0 %v1390
        %1394 = vmatprep.subr.bf16.mxu0 0
        %1395 = vmatpush1.bf16.msra.mxu0 0
        %1396 = vmatprep.subr.bf16.mxu0 0
        %1397 = vmatpush1.bf16.msra.mxu0 0
        %1398 = vmatprep.subr.bf16.mxu0 0
        %1399 = vmatpush1.bf16.msra.mxu0 0
        %1400 = vmatprep.subr.bf16.mxu0 0
        %1401 = vmatpush1.bf16.msra.mxu0 0
        %1402 = vmatprep.subr.bf16.mxu0 0
        %1403 = vmatpush1.bf16.msra.mxu0 0
        %1404 = vmatprep.subr.bf16.mxu0 0
        %1405 = vmatpush1.bf16.msra.mxu0 0
        %1406 = vmatprep.subr.bf16.mxu0 0
        %1407 = vmatpush1.bf16.msra.mxu0 0
        %1408 = vmatprep.subr.bf16.mxu0 0
        %1409 = vmatpush1.bf16.msra.mxu0 0
        %1410 = vmatprep.subr.bf16.mxu0 0
        %1411 = vmatpush1.bf16.msra.mxu0 0
        %1412 = vmatprep.subr.bf16.mxu0 0
        %1413 = vmatpush1.bf16.msra.mxu0 0
        %1414 = vmatprep.subr.bf16.mxu0 0
        %1415 = vmatpush1.bf16.msra.mxu0 0
        %1416 = vmatprep.subr.bf16.mxu0 0
        %1417 = vmatpush1.bf16.msra.mxu0 0
        %1418 = vmatprep.subr.bf16.mxu0 0
        %1419 = vmatpush1.bf16.msra.mxu0 0
        %1420 = vmatprep.subr.bf16.mxu0 0
        %1421 = vmatpush1.bf16.msra.mxu0 0
        %1422 = vmatprep.subr.bf16.mxu0 0
        %1423 = vmatpush1.bf16.msra.mxu0 0
        %1424 = vmatprep.mubr.bf16.mxu0 0
        %1425 = vmatmul.mubr.bf16.gmra.mrb[0].mxu0 %v1387
        %v1426 = vpop.f32.mrb[0].mxu0
        %v1427 = vadd.f32 0.0, %v1426
        %v1428 = vpop.f32.mrb[0].mxu0
        %v1429 = vpop.f32.mrb[0].mxu0
        %v1430 = vpop.f32.mrb[0].mxu0
        %1431 = vdwg.mxu0
        %v1432 = vld [vmem:[#allocation2] sm:$0xff]
        %v1433 = vld [vmem:[#allocation2 + $0x8] sm:$0xff]
        %v1434 = vpack.c.bf16 %v1427, %v1379
        %s1435 = scalar_lea.vmem [#allocation11], 8
        %v1436 = vld [vmem:[%s1435] sm:$0xf]
        %v1438 = vsel %vm671, %v1434, 0
        %v1441 = vsel %vm791, %v1436, 0
        %1443 = vmatprep.subr.bf16.mxu0 0
        %1444 = vmatpush1.bf16.msra.mxu0 %v1441
        %1445 = vmatprep.subr.bf16.mxu0 0
        %1446 = vmatpush1.bf16.msra.mxu0 0
        %1447 = vmatprep.subr.bf16.mxu0 0
        %1448 = vmatpush1.bf16.msra.mxu0 0
        %1449 = vmatprep.subr.bf16.mxu0 0
        %1450 = vmatpush1.bf16.msra.mxu0 0
        %1451 = vmatprep.subr.bf16.mxu0 0
        %1452 = vmatpush1.bf16.msra.mxu0 0
        %1453 = vmatprep.subr.bf16.mxu0 0
        %1454 = vmatpush1.bf16.msra.mxu0 0
        %1455 = vmatprep.subr.bf16.mxu0 0
        %1456 = vmatpush1.bf16.msra.mxu0 0
        %1457 = vmatprep.subr.bf16.mxu0 0
        %1458 = vmatpush1.bf16.msra.mxu0 0
        %1459 = vmatprep.subr.bf16.mxu0 0
        %1460 = vmatpush1.bf16.msra.mxu0 0
        %1461 = vmatprep.subr.bf16.mxu0 0
        %1462 = vmatpush1.bf16.msra.mxu0 0
        %1463 = vmatprep.subr.bf16.mxu0 0
        %1464 = vmatpush1.bf16.msra.mxu0 0
        %1465 = vmatprep.subr.bf16.mxu0 0
        %1466 = vmatpush1.bf16.msra.mxu0 0
        %1467 = vmatprep.subr.bf16.mxu0 0
        %1468 = vmatpush1.bf16.msra.mxu0 0
        %1469 = vmatprep.subr.bf16.mxu0 0
        %1470 = vmatpush1.bf16.msra.mxu0 0
        %1471 = vmatprep.subr.bf16.mxu0 0
        %1472 = vmatpush1.bf16.msra.mxu0 0
        %1473 = vmatprep.subr.bf16.mxu0 0
        %1474 = vmatpush1.bf16.msra.mxu0 0
        %1475 = vmatprep.mubr.bf16.mxu0 0
        %1476 = vmatmul.mubr.bf16.gmra.mrb[0].mxu0 %v1438
        %v1477 = vpop.f32.mrb[0].mxu0
        %v1478 = vadd.f32 0.0, %v1477
        %v1479 = vpop.f32.mrb[0].mxu0
        %v1480 = vpop.f32.mrb[0].mxu0
        %v1481 = vadd.f32 0.0, %v1480
        %v1482 = vpop.f32.mrb[0].mxu0
        %1483 = vdwg.mxu0
        %v1484 = vadd.f32 %v1432, %v1478
        %v1485 = vadd.f32 %v1433, %v1481
        %1486 = vst [vmem:[#allocation2] sm:$0xff] %v1484
        %1487 = vst [vmem:[#allocation2 + $0x8] sm:$0xff] %v1485
        %1488 = vrot.lane.b32.xlu0 %v647, 104
        %v1489 = vpop.permute.xlu0 %1488
        %1490 = vrot.lane.b32.xlu0 %v652, 104
        %v1491 = vpop.permute.xlu0 %1490
        %v1493 = vsel %vm671, %v1489, 0
        %v1496 = vsel %vm671, %v1491, 0
        %1498 = vmatprep.subr.bf16.mxu0 0
        %1499 = vmatpush1.bf16.xpose.msra.mxu0 %v1496
        %1500 = vmatprep.subr.bf16.mxu0 0
        %1501 = vmatpush1.bf16.xpose.msra.mxu0 0
        %1502 = vmatprep.subr.bf16.mxu0 0
        %1503 = vmatpush1.bf16.xpose.msra.mxu0 0
        %1504 = vmatprep.subr.bf16.mxu0 0
        %1505 = vmatpush1.bf16.xpose.msra.mxu0 0
        %1506 = vmatprep.subr.bf16.mxu0 0
        %1507 = vmatpush1.bf16.xpose.msra.mxu0 0
        %1508 = vmatprep.subr.bf16.mxu0 0
        %1509 = vmatpush1.bf16.xpose.msra.mxu0 0
        %1510 = vmatprep.subr.bf16.mxu0 0
        %1511 = vmatpush1.bf16.xpose.msra.mxu0 0
        %1512 = vmatprep.subr.bf16.mxu0 0
        %1513 = vmatpush1.bf16.xpose.msra.mxu0 0
        %1514 = vmatprep.subr.bf16.mxu0 0
        %1515 = vmatpush1.bf16.xpose.msra.mxu0 0
        %1516 = vmatprep.subr.bf16.mxu0 0
        %1517 = vmatpush1.bf16.xpose.msra.mxu0 0
        %1518 = vmatprep.subr.bf16.mxu0 0
        %1519 = vmatpush1.bf16.xpose.msra.mxu0 0
        %1520 = vmatprep.subr.bf16.mxu0 0
        %1521 = vmatpush1.bf16.xpose.msra.mxu0 0
        %1522 = vmatprep.subr.bf16.mxu0 0
        %1523 = vmatpush1.bf16.xpose.msra.mxu0 0
        %1524 = vmatprep.subr.bf16.mxu0 0
        %1525 = vmatpush1.bf16.xpose.msra.mxu0 0
        %1526 = vmatprep.subr.bf16.mxu0 0
        %1527 = vmatpush1.bf16.xpose.msra.mxu0 0
        %1528 = vmatprep.subr.bf16.mxu0 0
        %1529 = vmatpush1.bf16.xpose.msra.mxu0 0
        %1530 = vmatprep.mubr.bf16.mxu0 0
        %1531 = vmatmul.mubr.bf16.gmra.mrb[0].mxu0 %v1493
        %v1532 = vpop.f32.mrb[0].mxu0
        %v1533 = vadd.f32 %v664, %v1532
        %v1534 = vpop.f32.mrb[0].mxu0
        %v1535 = vpop.f32.mrb[0].mxu0
        %v1536 = vpop.f32.mrb[0].mxu0
        %1537 = vdwg.mxu0
        %1538 = vrot.lane.b32.xlu0 %v648, 104
        %v1539 = vpop.permute.xlu0 %1538
        %1540 = vrot.lane.b32.xlu0 %v653, 104
        %v1541 = vpop.permute.xlu0 %1540
        %v1543 = vsel %vm671, %v1539, 0
        %v1546 = vsel %vm671, %v1541, 0
        %1548 = vmatprep.subr.bf16.mxu0 0
        %1549 = vmatpush1.bf16.xpose.msra.mxu0 %v1546
        %1550 = vmatprep.subr.bf16.mxu0 0
        %1551 = vmatpush1.bf16.xpose.msra.mxu0 0
        %1552 = vmatprep.subr.bf16.mxu0 0
        %1553 = vmatpush1.bf16.xpose.msra.mxu0 0
        %1554 = vmatprep.subr.bf16.mxu0 0
        %1555 = vmatpush1.bf16.xpose.msra.mxu0 0
        %1556 = vmatprep.subr.bf16.mxu0 0
        %1557 = vmatpush1.bf16.xpose.msra.mxu0 0
        %1558 = vmatprep.subr.bf16.mxu0 0
        %1559 = vmatpush1.bf16.xpose.msra.mxu0 0
        %1560 = vmatprep.subr.bf16.mxu0 0
        %1561 = vmatpush1.bf16.xpose.msra.mxu0 0
        %1562 = vmatprep.subr.bf16.mxu0 0
        %1563 = vmatpush1.bf16.xpose.msra.mxu0 0
        %1564 = vmatprep.subr.bf16.mxu0 0
        %1565 = vmatpush1.bf16.xpose.msra.mxu0 0
        %1566 = vmatprep.subr.bf16.mxu0 0
        %1567 = vmatpush1.bf16.xpose.msra.mxu0 0
        %1568 = vmatprep.subr.bf16.mxu0 0
        %1569 = vmatpush1.bf16.xpose.msra.mxu0 0
        %1570 = vmatprep.subr.bf16.mxu0 0
        %1571 = vmatpush1.bf16.xpose.msra.mxu0 0
        %1572 = vmatprep.subr.bf16.mxu0 0
        %1573 = vmatpush1.bf16.xpose.msra.mxu0 0
        %1574 = vmatprep.subr.bf16.mxu0 0
        %1575 = vmatpush1.bf16.xpose.msra.mxu0 0
        %1576 = vmatprep.subr.bf16.mxu0 0
        %1577 = vmatpush1.bf16.xpose.msra.mxu0 0
        %1578 = vmatprep.subr.bf16.mxu0 0
        %1579 = vmatpush1.bf16.xpose.msra.mxu0 0
        %1580 = vmatprep.mubr.bf16.mxu0 0
        %1581 = vmatmul.mubr.bf16.gmra.mrb[0].mxu0 %v1543
        %v1582 = vpop.f32.mrb[0].mxu0
        %v1583 = vadd.f32 %v668, %v1582
        %v1584 = vpop.f32.mrb[0].mxu0
        %v1585 = vpop.f32.mrb[0].mxu0
        %v1586 = vpop.f32.mrb[0].mxu0
        %1587 = vdwg.mxu0
        %v1588 = vsel %vm671, %v1533, -inf
        %1589 = vmax.xlane.f32.xlu0 %v1588
        %v1590 = vpop.xlane.xlu0 %1589
        %v1591 = vsel %vm671, %v1583, -inf
        %1592 = vmax.xlane.f32.xlu0 %v1591
        %v1593 = vpop.xlane.xlu0 %1592
        %v1594 = vsub.f32 %v1533, %v1590
        %v1595 = vsub.f32 %v1583, %v1593
        %v1596 = vmul.f32 %v1594, 1.442695
        %v1597 = vpow.pop %v1596
        %v1598 = vmul.f32 %v1595, 1.442695
        %v1599 = vpow.pop %v1598
        %v1600 = vsel %vm671, %v1597, 0.0
        %1601 = vadd.xlane.f32.xlu0 %v1600
        %v1602 = vpop.xlane.xlu0 %1601
        %v1603 = vsel %vm671, %v1599, 0.0
        %1604 = vadd.xlane.f32.xlu0 %v1603
        %v1605 = vpop.xlane.xlu0 %1604
        %v1606 = vrcp.pop %v1602
        %v1607 = vrcp.pop %v1605
        %v1608 = vmul.f32 %v1597, %v1606
        %v1609 = vmul.f32 %v1599, %v1607
        %v1610 = vpack.c.bf16 %v1608, %v1608
        %v1611 = vpack.c.bf16 %v1609, %v1609
        %1612 = vrot.lane.b32.xlu0 %v657, 104
        %v1613 = vpop.permute.xlu0 %1612
        %v1615 = vsel %vm671, %v1610, 0
        %v1618 = vsel %vm791, %v1613, 0
        %1620 = vmatprep.subr.bf16.mxu0 0
        %1621 = vmatpush1.bf16.msra.mxu0 %v1618
        %1622 = vmatprep.subr.bf16.mxu0 0
        %1623 = vmatpush1.bf16.msra.mxu0 0
        %1624 = vmatprep.subr.bf16.mxu0 0
        %1625 = vmatpush1.bf16.msra.mxu0 0
        %1626 = vmatprep.subr.bf16.mxu0 0
        %1627 = vmatpush1.bf16.msra.mxu0 0
        %1628 = vmatprep.subr.bf16.mxu0 0
        %1629 = vmatpush1.bf16.msra.mxu0 0
        %1630 = vmatprep.subr.bf16.mxu0 0
        %1631 = vmatpush1.bf16.msra.mxu0 0
        %1632 = vmatprep.subr.bf16.mxu0 0
        %1633 = vmatpush1.bf16.msra.mxu0 0
        %1634 = vmatprep.subr.bf16.mxu0 0
        %1635 = vmatpush1.bf16.msra.mxu0 0
        %1636 = vmatprep.subr.bf16.mxu0 0
        %1637 = vmatpush1.bf16.msra.mxu0 0
        %1638 = vmatprep.subr.bf16.mxu0 0
        %1639 = vmatpush1.bf16.msra.mxu0 0
        %1640 = vmatprep.subr.bf16.mxu0 0
        %1641 = vmatpush1.bf16.msra.mxu0 0
        %1642 = vmatprep.subr.bf16.mxu0 0
        %1643 = vmatpush1.bf16.msra.mxu0 0
        %1644 = vmatprep.subr.bf16.mxu0 0
        %1645 = vmatpush1.bf16.msra.mxu0 0
        %1646 = vmatprep.subr.bf16.mxu0 0
        %1647 = vmatpush1.bf16.msra.mxu0 0
        %1648 = vmatprep.subr.bf16.mxu0 0
        %1649 = vmatpush1.bf16.msra.mxu0 0
        %1650 = vmatprep.subr.bf16.mxu0 0
        %1651 = vmatpush1.bf16.msra.mxu0 0
        %1652 = vmatprep.mubr.bf16.mxu0 0
        %1653 = vmatmul.mubr.bf16.gmra.mrb[0].mxu0 %v1615
        %v1654 = vpop.f32.mrb[0].mxu0
        %v1655 = vadd.f32 0.0, %v1654
        %v1656 = vpop.f32.mrb[0].mxu0
        %v1657 = vpop.f32.mrb[0].mxu0
        %v1658 = vpop.f32.mrb[0].mxu0
        %1659 = vdwg.mxu0
        %1660 = vrot.lane.b32.xlu0 %v658, 104
        %v1661 = vpop.permute.xlu0 %1660
        %v1663 = vsel %vm671, %v1611, 0
        %v1666 = vsel %vm791, %v1661, 0
        %1668 = vmatprep.subr.bf16.mxu0 0
        %1669 = vmatpush1.bf16.msra.mxu0 %v1666
        %1670 = vmatprep.subr.bf16.mxu0 0
        %1671 = vmatpush1.bf16.msra.mxu0 0
        %1672 = vmatprep.subr.bf16.mxu0 0
        %1673 = vmatpush1.bf16.msra.mxu0 0
        %1674 = vmatprep.subr.bf16.mxu0 0
        %1675 = vmatpush1.bf16.msra.mxu0 0
        %1676 = vmatprep.subr.bf16.mxu0 0
        %1677 = vmatpush1.bf16.msra.mxu0 0
        %1678 = vmatprep.subr.bf16.mxu0 0
        %1679 = vmatpush1.bf16.msra.mxu0 0
        %1680 = vmatprep.subr.bf16.mxu0 0
        %1681 = vmatpush1.bf16.msra.mxu0 0
        %1682 = vmatprep.subr.bf16.mxu0 0
        %1683 = vmatpush1.bf16.msra.mxu0 0
        %1684 = vmatprep.subr.bf16.mxu0 0
        %1685 = vmatpush1.bf16.msra.mxu0 0
        %1686 = vmatprep.subr.bf16.mxu0 0
        %1687 = vmatpush1.bf16.msra.mxu0 0
        %1688 = vmatprep.subr.bf16.mxu0 0
        %1689 = vmatpush1.bf16.msra.mxu0 0
        %1690 = vmatprep.subr.bf16.mxu0 0
        %1691 = vmatpush1.bf16.msra.mxu0 0
        %1692 = vmatprep.subr.bf16.mxu0 0
        %1693 = vmatpush1.bf16.msra.mxu0 0
        %1694 = vmatprep.subr.bf16.mxu0 0
        %1695 = vmatpush1.bf16.msra.mxu0 0
        %1696 = vmatprep.subr.bf16.mxu0 0
        %1697 = vmatpush1.bf16.msra.mxu0 0
        %1698 = vmatprep.subr.bf16.mxu0 0
        %1699 = vmatpush1.bf16.msra.mxu0 0
        %1700 = vmatprep.mubr.bf16.mxu0 0
        %1701 = vmatmul.mubr.bf16.gmra.mrb[0].mxu0 %v1663
        %v1702 = vpop.f32.mrb[0].mxu0
        %v1703 = vadd.f32 0.0, %v1702
        %v1704 = vpop.f32.mrb[0].mxu0
        %v1705 = vpop.f32.mrb[0].mxu0
        %v1706 = vpop.f32.mrb[0].mxu0
        %1707 = vdwg.mxu0
        %v1708 = vld [vmem:[#allocation2] sm:$0xff]
        %v1709 = vld [vmem:[#allocation2 + $0x8] sm:$0xff]
        %v1710 = vpack.c.bf16 %v1703, %v1655
        %s1711 = scalar_lea.vmem [#allocation11], 12
        %v1712 = vld [vmem:[%s1711] sm:$0xf]
        %v1714 = vsel %vm671, %v1710, 0
        %v1717 = vsel %vm791, %v1712, 0
        %1719 = vmatprep.subr.bf16.mxu0 0
        %1720 = vmatpush1.bf16.msra.mxu0 %v1717
        %1721 = vmatprep.subr.bf16.mxu0 0
        %1722 = vmatpush1.bf16.msra.mxu0 0
        %1723 = vmatprep.subr.bf16.mxu0 0
        %1724 = vmatpush1.bf16.msra.mxu0 0
        %1725 = vmatprep.subr.bf16.mxu0 0
        %1726 = vmatpush1.bf16.msra.mxu0 0
        %1727 = vmatprep.subr.bf16.mxu0 0
        %1728 = vmatpush1.bf16.msra.mxu0 0
        %1729 = vmatprep.subr.bf16.mxu0 0
        %1730 = vmatpush1.bf16.msra.mxu0 0
        %1731 = vmatprep.subr.bf16.mxu0 0
        %1732 = vmatpush1.bf16.msra.mxu0 0
        %1733 = vmatprep.subr.bf16.mxu0 0
        %1734 = vmatpush1.bf16.msra.mxu0 0
        %1735 = vmatprep.subr.bf16.mxu0 0
        %1736 = vmatpush1.bf16.msra.mxu0 0
        %1737 = vmatprep.subr.bf16.mxu0 0
        %1738 = vmatpush1.bf16.msra.mxu0 0
        %1739 = vmatprep.subr.bf16.mxu0 0
        %1740 = vmatpush1.bf16.msra.mxu0 0
        %1741 = vmatprep.subr.bf16.mxu0 0
        %1742 = vmatpush1.bf16.msra.mxu0 0
        %1743 = vmatprep.subr.bf16.mxu0 0
        %1744 = vmatpush1.bf16.msra.mxu0 0
        %1745 = vmatprep.subr.bf16.mxu0 0
        %1746 = vmatpush1.bf16.msra.mxu0 0
        %1747 = vmatprep.subr.bf16.mxu0 0
        %1748 = vmatpush1.bf16.msra.mxu0 0
        %1749 = vmatprep.subr.bf16.mxu0 0
        %1750 = vmatpush1.bf16.msra.mxu0 0
        %1751 = vmatprep.mubr.bf16.mxu0 0
        %1752 = vmatmul.mubr.bf16.gmra.mrb[0].mxu0 %v1714
        %v1753 = vpop.f32.mrb[0].mxu0
        %v1754 = vadd.f32 0.0, %v1753
        %v1755 = vpop.f32.mrb[0].mxu0
        %v1756 = vpop.f32.mrb[0].mxu0
        %v1757 = vadd.f32 0.0, %v1756
        %v1758 = vpop.f32.mrb[0].mxu0
        %1759 = vdwg.mxu0
        %v1760 = vadd.f32 %v1708, %v1754
        %v1761 = vadd.f32 %v1709, %v1757
        %1762 = vst [vmem:[#allocation2] sm:$0xff] %v1760
        %1763 = vst [vmem:[#allocation2 + $0x8] sm:$0xff] %v1761
        %v1764 = vld [vmem:[#allocation2] sm:$0xff]
        %v1765 = vld [vmem:[#allocation2 + $0x8] sm:$0xff]
        %v1766 = vld [vmem:[#allocation12] sm:$0x1]
        %v1768 = vlaneseq
        %v1769 = vshrl.u32 %v1768, 7
        %v1770 = vsub.s32 0, %v1769
        %v1771 = vrot.slane %v1766, %v1770
        %v1773 = vadd.f32 %v1764, %v1771
        %v1774 = vadd.f32 %v1765, %v1771
        %1775 = vst [vmem:[%s363] sm:$0xff] %v1773
        %1776 = vst [vmem:[%s363 + $0x8] sm:$0xff] %v1774
        %s1777 = sand.u32 %s172, 1
        %s1778 = scalar_lea.sflag [#allocation5], %s1777
        %s1779 = sand.u32 %s172, 1
        %s1780 = smul.addr %s1779, 16
        %s1781 = scalar_lea.vmem [#allocation14], %s1780
        // Predicated region
        $region69: #{tpu_custom_call.1} parent=43 // pred_check
          %p1782 = pneg %p182
        $region70: #{tpu_custom_call.1} parent=43 // pred_check_branch
          %1784 = sbr.rel (%p1782) target = $region72
        $region71: #{tpu_custom_call.1} parent=43 // pred_region
          %s1785 = smul.u32 2, %s28
          %s1787 = ssub.s32 256, 256
          %1788 = vsyncadd %s1778, %s1787
          %s1789 = smul.addr %s1785, 128
          %s1790 = scalar_lea.hbm %s6, %s1789
          %s1791 = sshll.u32 %s1781, 4
          %s1792 = int_to_ptr.vmem [resolvable:$true] %s1791
          %1797 = dma.vmem_to_hbm [thread:$0]  %s1792, 256, %s1790, %s1778, 128, 128, 8
        $region72: #{tpu_custom_call.1} parent=43 // pred_fallthru
          _
      $region44: #{tpu_custom_call.1} parent=5 // pred_fallthru
        _
      %p1798 = scmp.le.s32.totalorder 2, %s23
      // Predicated region
      $region73: #{tpu_custom_call.1} parent=5 // pred_check
        %p1799 = pneg %p1798
      $region74: #{tpu_custom_call.1} parent=5 // pred_check_branch
        %1801 = sbr.rel (%p1799) target = $region76
      $region75: #{tpu_custom_call.1} parent=5 // pred_region
        %s1802 = ssub.s32 %s23, 2
        // Predicated region
        $region77: #{tpu_custom_call.1} parent=75 // pred_check
          %p1803 = pneg %p188
        $region78: #{tpu_custom_call.1} parent=75 // pred_check_branch
          %1805 = sbr.rel (%p1803) target = $region80
        $region79: #{tpu_custom_call.1} parent=75 // pred_region
          %s1806 = sand.u32 %s173, 1
          %s1807 = scalar_lea.sflag [#allocation5], %s1806
          %s1808 = sand.u32 %s173, 1
          %s1809 = smul.addr %s1808, 16
          %s1810 = scalar_lea.vmem [#allocation14], %s1809
          %1811 = dma.done %s1807, 256
        $region80: #{tpu_custom_call.1} parent=75 // pred_fallthru
          _
      $region76: #{tpu_custom_call.1} parent=5 // pred_fallthru
        _
    $region6: #{tpu_custom_call.1} parent=1 // loop_footer
      %s27 = sadd.s32 1, %s23
    $region7: #{tpu_custom_call.1} parent=1 // loop_footer_branch
      %22 = sbr.rel target = $region3
    $region8: #{tpu_custom_call.1} parent=1 // loop_exit
      _
    %1812 = vsyncpa [#allocation4], 1
    %s1813 = scalar_lea.sflag [#allocation4], 1
    %1814 = vsyncpa %s1813, 1
    %1815 = vsyncpa [#allocation7], 1
    %s1816 = scalar_lea.sflag [#allocation7], 1
    %1817 = vsyncpa %s1816, 1
    %1818 = vsyncpa [#allocation10], 1
    %1819 = vsyncpa [#allocation13], 1
    %1820 = vsyncpa [#allocation5], 1
    %s1821 = scalar_lea.sflag [#allocation5], 1
    %1822 = vsyncpa %s1821, 1

</llo_original>
